<compile_context>
chip_gen: v5e
topology: v5e:2x2
jax: 0.10.0
libtpu: 0.0.40
codegen_flags: <defaults>
</compile_context>

<pallas_src>
import functools

import jax
import jax.numpy as jnp
import numpy as np
from jax.experimental import pallas as pl
from jax.experimental.pallas import tpu as pltpu


def _round_up(x, m):
    return ((x + m - 1) // m) * m


def _sw_qk_rpb_kernel(rpb_ref, q_ref, k_ref, v_ref, yy_ref, xx_ref,
                      attn_ref, vout_ref, kbuf, vbuf, *,
                      H, W, ws, num_heads, halo, tn, T, Np):
    # rpb_ref : SMEM (num_heads, local_len) f32
    # q_ref   : VMEM (head_dim, tn)          lane tile of q (already normalized + scaled)
    # k_ref   : VMEM (head_dim, Np)          full (un-normalized) K for this (b, h) -- resident
    # v_ref   : VMEM (head_dim, Np)          full V for this (b, h) -- resident
    # yy_ref  : VMEM (1, tn) int32           row index of each pixel in this lane tile
    # xx_ref  : VMEM (1, tn) int32           col index of each pixel in this lane tile
    # attn_ref: VMEM (local_len, tn) f32
    # vout_ref: VMEM (local_len, head_dim, tn)
    # kbuf    : VMEM (T, head_dim, 2*halo + tn)   halo'd zero-padded normalized-K tile buffers
    # vbuf    : VMEM (T, head_dim, 2*halo + tn)   halo'd zero-padded V tile buffers
    p = ws // 2
    pad = p * W + p
    t = pl.program_id(1)
    head = pl.program_id(0) % num_heads
    head_dim = k_ref.shape[0]
    Lt = kbuf.shape[2]                      # = 2*halo + tn

    # ---- per-(batch, head) fill of the zero-padded, halo'd K/V tile buffers -----------------
    # Scratch persists across grid steps but is per-TensorCore, so the fill is gated on the
    # innermost ("arbitrary") tile axis t == 0 (a global program_id(0) == 0 guard would never
    # fire on the second megacore's grid chunk).  All slice bounds below are static and, for
    # T > 1, 128-lane aligned (halo and tn are multiples of 128) -> unmasked vst.
    @pl.when(t == 0)
    def _fill():
        for tt in range(T):                           # static unroll over tiles
            lo_g = tt * tn - halo                     # first global lane covered by buffer pos 0
            hi_g = tt * tn + tn + halo
            src_lo = max(lo_g, 0)
            src_hi = min(hi_g, Np)
            dst_lo = src_lo - lo_g
            dst_hi = dst_lo + (src_hi - src_lo)
            if dst_lo > 0:                            # left zero pad (row-OOB reads land here)
                kbuf[tt, :, :dst_lo] = jnp.zeros((head_dim, dst_lo), kbuf.dtype)
                vbuf[tt, :, :dst_lo] = jnp.zeros((head_dim, dst_lo), vbuf.dtype)
            if dst_hi < Lt:                           # right zero pad
                kbuf[tt, :, dst_hi:] = jnp.zeros((head_dim, Lt - dst_hi), kbuf.dtype)
                vbuf[tt, :, dst_hi:] = jnp.zeros((head_dim, Lt - dst_hi), vbuf.dtype)
            # K: per-pixel L2 normalization over head_dim (sublane reduce + EUP rsqrt).
            ks = k_ref[:, src_lo:src_hi].astype(jnp.float32)
            ss = jnp.sum(ks * ks, axis=0, keepdims=True)
            kn = ks * jax.lax.rsqrt(jnp.maximum(ss, jnp.float32(1e-24)))
            kbuf[tt, :, dst_lo:dst_hi] = kn.astype(kbuf.dtype)
            vbuf[tt, :, dst_lo:dst_hi] = v_ref[:, src_lo:src_hi].astype(vbuf.dtype)

    # ---- per-(b*h, tile) sliding-window QK + RPB and V unfold -------------------------------
    q = q_ref[...]                          # native dtype (bf16 multiplies on v6e/v7x)
    yy = yy_ref[...]                        # (1, tn)
    xx = xx_ref[...]                        # (1, tn)
    neg_inf = jnp.float32(-jnp.inf)

    # TODO(synk): after further tiling, the dx = +/-1 shifts could reuse a vreg-resident dy-row
    # slab via pltpu.roll (XLU) instead of re-slicing the buffer; kept as 9 direct reads here.
    for j in range(ws * ws):                # static unroll over window positions
        dy, dx = divmod(j, ws)
        start = halo - pad + dy * W + dx    # static lane offset into the halo'd tile buffer
        kwin = kbuf[t, :, start:start + tn]             # (head_dim, tn)
        vwin = vbuf[t, :, start:start + tn]
        # QK: elementwise VPU multiply in native dtype, f32 accumulation of the sublane reduce.
        s = jnp.sum((q * kwin).astype(jnp.float32), axis=0, keepdims=True)
        s = s + rpb_ref[head, j]
        # Column-wrap mask only (flat window reads wrap rows at the image border).
        col_oob = (xx < p - dx) | (xx >= W + p - dx)                      # (1, tn)
        # Full geometric OOB mask (row + column) for attn's -inf fill.
        oob = col_oob | (yy < p - dy) | (yy >= H + p - dy)
        attn_ref[j:j + 1, :] = jnp.where(oob, neg_inf, s)
        # V: row-OOB reads already hit exact zeros from the padded buffer; only column wraps
        # must be masked to match F.unfold's zero padding exactly.
        vout_ref[j, :, :] = jnp.where(col_oob, jnp.zeros_like(vwin), vwin).astype(vout_ref.dtype)


def swattention_qk_rpb_pallas(kv, q_norm_scaled, relative_pos_bias_local, padding_mask,
                              num_heads, head_dim, window_size, local_len, H, W,
                              *, max_lane_tile=2048, kernel_layout=False):
    del padding_mask  # regenerated in-kernel (geometric OOB mask, same as the CUDA path)
    B, N, C2 = kv.shape
    assert N == H * W and local_len == window_size * window_size
    assert C2 == 2 * num_heads * head_dim
    p = window_size // 2
    pad = p * W + p
    G = B * num_heads

    # ---- lane tiling of the flattened spatial axis (128-aligned tiles when tiled) -----------
    if N <= max_lane_tile:
        tn, T = N, 1
    else:
        T = pl.cdiv(N, max_lane_tile)
        tn = _round_up(pl.cdiv(N, T), 128)
    Np = tn * T
    halo = _round_up(pad, 128) if pad > 0 else 0
    Lt = tn + 2 * halo

    # ---- layout plumbing: channels-first (head_dim on sublanes, flattened spatial on lanes) --
    k = kv[..., :num_heads * head_dim].reshape(B, N, num_heads, head_dim)
    v = kv[..., num_heads * head_dim:].reshape(B, N, num_heads, head_dim)
    k_cf = jnp.transpose(k, (0, 2, 3, 1)).reshape(G, head_dim, N)
    v_cf = jnp.transpose(v, (0, 2, 3, 1)).reshape(G, head_dim, N)
    q_cf = jnp.transpose(q_norm_scaled, (0, 1, 3, 2)).reshape(G, head_dim, N)
    if Np > N:  # zero lane-padding so tiles are 128-aligned; padded lanes are discarded later
        lane_pad = ((0, 0), (0, 0), (0, Np - N))
        k_cf = jnp.pad(k_cf, lane_pad)
        v_cf = jnp.pad(v_cf, lane_pad)
        q_cf = jnp.pad(q_cf, lane_pad)

    idx = jnp.arange(Np, dtype=jnp.int32)
    yy = (idx // W).reshape(1, Np)
    xx = (idx % W).reshape(1, Np)
    rpb = relative_pos_bias_local.astype(jnp.float32)

    # ---- explicit VMEM budget -> vmem_limit_bytes (review item) -----------------------------
    kv_bytes = jnp.dtype(kv.dtype).itemsize
    q_bytes = jnp.dtype(q_norm_scaled.dtype).itemsize

    def r8(x):
        return _round_up(max(int(x), 1), 8)

    budget = (2 * r8(head_dim) * tn * q_bytes                  # q blocks (double buffered)
              + 2 * 2 * r8(head_dim) * Np * kv_bytes           # k, v resident blocks
              + 2 * 2 * 8 * tn * 4                             # yy, xx
              + 2 * r8(local_len) * tn * 4                     # attn out block (9 -> 16 sublanes)
              + 2 * local_len * r8(head_dim) * tn * kv_bytes   # v_local out block
              + 2 * T * r8(head_dim) * Lt * kv_bytes)          # kbuf + vbuf scratch
    vmem_limit = int(min(max(budget * 3 // 2 + (2 << 20), 32 << 20), 64 << 20))

    kernel = functools.partial(_sw_qk_rpb_kernel, H=H, W=W, ws=window_size,
                               num_heads=num_heads, halo=halo, tn=tn, T=T, Np=Np)

    attn, vout = pl.pallas_call(
        kernel,
        out_shape=(
            jax.ShapeDtypeStruct((G, local_len, Np), jnp.float32),
            jax.ShapeDtypeStruct((G, local_len, head_dim, Np), kv.dtype),
        ),
        grid=(G, T),
        in_specs=[
            pl.BlockSpec(memory_space=pltpu.MemorySpace.SMEM),                 # rpb
            pl.BlockSpec((None, head_dim, tn), lambda g, t: (g, 0, t)),        # q  (lane tiles)
            pl.BlockSpec((None, head_dim, Np), lambda g, t: (g, 0, 0)),        # k  (resident per g)
            pl.BlockSpec((None, head_dim, Np), lambda g, t: (g, 0, 0)),        # v  (resident per g)
            pl.BlockSpec((1, tn), lambda g, t: (0, t)),                        # yy
            pl.BlockSpec((1, tn), lambda g, t: (0, t)),                        # xx
        ],
        out_specs=(
            pl.BlockSpec((None, local_len, tn), lambda g, t: (g, 0, t)),
            pl.BlockSpec((None, local_len, head_dim, tn), lambda g, t: (g, 0, 0, t)),
        ),
        scratch_shapes=[
            pltpu.VMEM((T, head_dim, Lt), kv.dtype),   # halo'd zero-padded normalized K tiles
            pltpu.VMEM((T, head_dim, Lt), kv.dtype),   # halo'd zero-padded V tiles
        ],
        compiler_params=pltpu.CompilerParams(
            # t ("arbitrary") must not be megacore-split: the t==0 fill of the per-core scratch
            # has to run on the same core as the rest of that (b, h)'s tiles.
            dimension_semantics=("parallel", "arbitrary"),
            vmem_limit_bytes=vmem_limit),
    )(rpb, q_cf, k_cf, v_cf, yy, xx)

    attn = attn[:, :, :N].reshape(B, num_heads, local_len, N)
    vout = vout[:, :, :, :N].reshape(B, num_heads, local_len, head_dim, N)
    if kernel_layout:
        # Lane-dense layout for a fused downstream consumer: attn (B, nh, local_len, N),
        # v_local (B, nh, local_len, head_dim, N) -- skips the HBM transpose pass over v_local.
        return attn, vout
    # PyTorch convention (pure layout plumbing in XLA; kernel stores stay lane-dense).
    attn_local = jnp.transpose(attn, (0, 1, 3, 2))
    v_local = jnp.transpose(vout, (0, 1, 4, 3, 2))
    return attn_local, v_local


# ---------------------------------------------------------------------------------------------
# Pure-JAX reference mirroring the PyTorch fallback (for verification only).
# ---------------------------------------------------------------------------------------------
def swattention_qk_rpb_ref(kv, q, rpb, padding_mask, num_heads, head_dim,
                           window_size, local_len, H, W):
    B, N, _ = kv.shape
    p = window_size // 2
    k = kv[..., :num_heads * head_dim].reshape(B, N, num_heads, head_dim)
    k = k / jnp.maximum(jnp.sqrt(jnp.sum(k * k, axis=-1, keepdims=True)), 1e-12)
    v = kv[..., num_heads * head_dim:].reshape(B, N, num_heads, head_dim)
    k_img = jnp.transpose(k.reshape(B, H, W, num_heads, head_dim), (0, 3, 4, 1, 2))
    v_img = jnp.transpose(v.reshape(B, H, W, num_heads, head_dim), (0, 3, 4, 1, 2))
    padw = ((0, 0), (0, 0), (0, 0), (p, p), (p, p))
    k_pad = jnp.pad(k_img, padw)
    v_pad = jnp.pad(v_img, padw)
    k_unf = jnp.stack([k_pad[:, :, :, dy:dy + H, dx:dx + W].reshape(B, num_heads, head_dim, N)
                       for dy in range(window_size) for dx in range(window_size)], axis=3)
    v_unf = jnp.stack([v_pad[:, :, :, dy:dy + H, dx:dx + W].reshape(B, num_heads, head_dim, N)
                       for dy in range(window_size) for dx in range(window_size)], axis=3)
    k_local = jnp.transpose(k_unf, (0, 1, 4, 2, 3))   # (B, nh, N, hd, ll)
    v_local = jnp.transpose(v_unf, (0, 1, 4, 2, 3))
    attn = jnp.einsum("bhnd,bhndl->bhnl", q, k_local) + rpb[None, :, None, :]
    attn = jnp.where(padding_mask[None, None, :, :], -jnp.inf, attn)
    return attn, v_local


def make_padding_mask(H, W, window_size):
    p = window_size // 2
    ys, xs = np.meshgrid(np.arange(H), np.arange(W), indexing="ij")
    cols = []
    for dy in range(window_size):
        for dx in range(window_size):
            yy = ys + dy - p
            xx = xs + dx - p
            cols.append((yy < 0) | (yy >= H) | (xx < 0) | (xx >= W))
    return jnp.asarray(np.stack(cols, axis=-1).reshape(H * W, window_size * window_size))


def _run_case(key, B, num_heads, head_dim, H, W, window_size):
    N = H * W
    local_len = window_size * window_size
    k0, k1, k2 = jax.random.split(key, 3)
    kv = jax.random.normal(k0, (B, N, 2 * num_heads * head_dim), dtype=jnp.float32)
    q = jax.random.normal(k1, (B, num_heads, N, head_dim), dtype=jnp.float32)
    # q_norm_scaled arrives already L2-normalized and temperature-scaled
    q_norm_scaled = q / jnp.maximum(
        jnp.sqrt(jnp.sum(q * q, axis=-1, keepdims=True)), 1e-12) * (head_dim ** -0.5)
    rpb = 0.02 * jax.random.normal(k2, (num_heads, local_len), dtype=jnp.float32)
    padding_mask = make_padding_mask(H, W, window_size)   # (N, local_len) bool

    attn_local, v_local = swattention_qk_rpb_pallas(
        kv, q_norm_scaled, rpb, padding_mask,
        num_heads, head_dim, window_size, local_len, H, W)
    jax.block_until_ready((attn_local, v_local))

    attn_ref, v_ref = swattention_qk_rpb_ref(
        kv, q_norm_scaled, rpb, padding_mask,
        num_heads, head_dim, window_size, local_len, H, W)

    assert attn_local.shape == (B, num_heads, N, local_len)
    assert v_local.shape == (B, num_heads, N, head_dim, local_len)
    assert np.allclose(np.asarray(attn_local), np.asarray(attn_ref), atol=1e-5, rtol=1e-5)
    assert np.allclose(np.asarray(v_local), np.asarray(v_ref), atol=1e-6, rtol=1e-6)


if __name__ == "__main__":
    key = jax.random.PRNGKey(0)
    k_a, k_b = jax.random.split(key)
    # Small case (single lane tile, T = 1).
    _run_case(k_a, B=2, num_heads=2, head_dim=8, H=8, W=8, window_size=3)
    # Larger spatial case exercising the 128-aligned lane tiling (N = 2209 > 2048 -> T = 2,
    # including the lane-padded Np > N path), still small overall.
    _run_case(k_b, B=1, num_heads=1, head_dim=8, H=47, W=47, window_size=3)
    print("KERNEL_OK")
</pallas_src>

<mosaic_0001>
module attributes {stable_mosaic.version = 11 : i64} {
  func.func @_sw_qk_rpb_kernel(%arg0: i32, %arg1: i32, %arg2: memref<2x9xf32, #tpu.memory_space<smem>>, %arg3: memref<1x8x64xf32, #tpu.memory_space<vmem>>, %arg4: memref<1x8x64xf32, #tpu.memory_space<vmem>>, %arg5: memref<1x8x64xf32, #tpu.memory_space<vmem>>, %arg6: memref<1x64xi32, #tpu.memory_space<vmem>>, %arg7: memref<1x64xi32, #tpu.memory_space<vmem>>, %arg8: memref<1x9x64xf32, #tpu.memory_space<vmem>>, %arg9: memref<1x9x8x64xf32, #tpu.memory_space<vmem>>, %arg10: memref<1x8x320xf32, #tpu.memory_space<vmem>>, %arg11: memref<1x8x320xf32, #tpu.memory_space<vmem>>) attributes {dimension_semantics = [#tpu.dimension_semantics<parallel>, #tpu.dimension_semantics<arbitrary>], iteration_bounds = array<i64: 4, 1>, scalar_prefetch = 0 : i64, scratch_operands = 2 : i64, tpu.core_type = #tpu.core_type<tc>, window_params = [{transform_indices = @transform_0, window_bounds = array<i64: 2, 9>}, {transform_indices = @transform_1, window_bounds = array<i64: 1, 8, 64>}, {transform_indices = @transform_2, window_bounds = array<i64: 1, 8, 64>}, {transform_indices = @transform_3, window_bounds = array<i64: 1, 8, 64>}, {transform_indices = @transform_4, window_bounds = array<i64: 1, 64>}, {transform_indices = @transform_5, window_bounds = array<i64: 1, 64>}, {transform_indices = @transform_6, window_bounds = array<i64: 1, 9, 64>}, {transform_indices = @transform_7, window_bounds = array<i64: 1, 9, 8, 64>}]} {
    %c2_i32 = arith.constant 2 : i32
    %c0_i32 = arith.constant 0 : i32
    %0 = arith.cmpi eq, %c2_i32, %c0_i32 : i32
    %c1_i32 = arith.constant 1 : i32
    %1 = arith.select %0, %c1_i32, %c2_i32 : i32
    %2 = arith.remsi %arg0, %1 : i32
    %c0_i32_0 = arith.constant 0 : i32
    %3 = arith.cmpi ne, %2, %c0_i32_0 : i32
    %c0_i32_1 = arith.constant 0 : i32
    %4 = arith.cmpi slt, %2, %c0_i32_1 : i32
    %c0_i32_2 = arith.constant 0 : i32
    %5 = arith.cmpi slt, %1, %c0_i32_2 : i32
    %6 = arith.xori %4, %5 : i1
    %7 = arith.andi %6, %3 : i1
    %8 = arith.addi %2, %1 : i32
    %9 = arith.select %7, %8, %2 : i32
    %c0_i32_3 = arith.constant 0 : i32
    %10 = arith.cmpi eq, %arg1, %c0_i32_3 : i32
    %11 = arith.extui %10 : i1 to i32
    %c0_i32_4 = arith.constant 0 : i32
    %12 = arith.cmpi ne, %11, %c0_i32_4 : i32
    scf.if %12 {
      %cst_160 = arith.constant 0.000000e+00 : f32
      %341 = vector.broadcast %cst_160 : f32 to vector<8x128xf32>
      %c0_161 = arith.constant 0 : index
      %c0_162 = arith.constant 0 : index
      %c0_163 = arith.constant 0 : index
      %342 = vector.load %arg10[%c0_161, %c0_162, %c0_163] : memref<1x8x320xf32, #tpu.memory_space<vmem>>, vector<1x8x128xf32>
      %343 = vector.shape_cast %342 : vector<1x8x128xf32> to vector<8x128xf32>
      %344 = vector.shape_cast %341 : vector<8x128xf32> to vector<1x8x128xf32>
      tpu.vector_store %arg10[%c0_161, %c0_162, %c0_163], %344 {strides = array<i32>} : memref<1x8x320xf32, #tpu.memory_space<vmem>>, vector<1x8x128xf32>,
      %cst_164 = arith.constant 0.000000e+00 : f32
      %345 = vector.broadcast %cst_164 : f32 to vector<8x128xf32>
      %c0_165 = arith.constant 0 : index
      %c0_166 = arith.constant 0 : index
      %c0_167 = arith.constant 0 : index
      %346 = vector.load %arg11[%c0_165, %c0_166, %c0_167] : memref<1x8x320xf32, #tpu.memory_space<vmem>>, vector<1x8x128xf32>
      %347 = vector.shape_cast %346 : vector<1x8x128xf32> to vector<8x128xf32>
      %348 = vector.shape_cast %345 : vector<8x128xf32> to vector<1x8x128xf32>
      tpu.vector_store %arg11[%c0_165, %c0_166, %c0_167], %348 {strides = array<i32>} : memref<1x8x320xf32, #tpu.memory_space<vmem>>, vector<1x8x128xf32>,
      %cst_168 = arith.constant 0.000000e+00 : f32
      %349 = vector.broadcast %cst_168 : f32 to vector<8x128xf32>
      %c0_169 = arith.constant 0 : index
      %c0_170 = arith.constant 0 : index
      %c192 = arith.constant 192 : index
      %350 = vector.load %arg10[%c0_169, %c0_170, %c192] : memref<1x8x320xf32, #tpu.memory_space<vmem>>, vector<1x8x128xf32>
      %351 = vector.shape_cast %350 : vector<1x8x128xf32> to vector<8x128xf32>
      %352 = vector.shape_cast %349 : vector<8x128xf32> to vector<1x8x128xf32>
      tpu.vector_store %arg10[%c0_169, %c0_170, %c192], %352 {strides = array<i32>} : memref<1x8x320xf32, #tpu.memory_space<vmem>>, vector<1x8x128xf32>,
      %cst_171 = arith.constant 0.000000e+00 : f32
      %353 = vector.broadcast %cst_171 : f32 to vector<8x128xf32>
      %c0_172 = arith.constant 0 : index
      %c0_173 = arith.constant 0 : index
      %c192_174 = arith.constant 192 : index
      %354 = vector.load %arg11[%c0_172, %c0_173, %c192_174] : memref<1x8x320xf32, #tpu.memory_space<vmem>>, vector<1x8x128xf32>
      %355 = vector.shape_cast %354 : vector<1x8x128xf32> to vector<8x128xf32>
      %356 = vector.shape_cast %353 : vector<8x128xf32> to vector<1x8x128xf32>
      tpu.vector_store %arg11[%c0_172, %c0_173, %c192_174], %356 {strides = array<i32>} : memref<1x8x320xf32, #tpu.memory_space<vmem>>, vector<1x8x128xf32>,
      %c0_175 = arith.constant 0 : index
      %c0_176 = arith.constant 0 : index
      %c0_177 = arith.constant 0 : index
      %357 = vector.load %arg4[%c0_175, %c0_176, %c0_177] : memref<1x8x64xf32, #tpu.memory_space<vmem>>, vector<1x8x64xf32>
      %358 = vector.shape_cast %357 : vector<1x8x64xf32> to vector<8x64xf32>
      %359 = arith.mulf %358, %358 : vector<8x64xf32>
      %cst_178 = arith.constant dense<0.000000e+00> : vector<64xf32>
      %360 = vector.multi_reduction <add>, %359, %cst_178 [0] : vector<8x64xf32> to vector<64xf32>
      %361 = vector.shape_cast %360 : vector<64xf32> to vector<1x64xf32>
      %cst_179 = arith.constant 1.000000e-24 : f32
      %362 = vector.broadcast %cst_179 : f32 to vector<1x64xf32>
      %363 = arith.maximumf %361, %362 : vector<1x64xf32>
      %364 = math.rsqrt %363 : vector<1x64xf32>
      %365 = vector.broadcast %364 : vector<1x64xf32> to vector<8x64xf32>
      %366 = arith.mulf %358, %365 : vector<8x64xf32>
      %c0_180 = arith.constant 0 : index
      %c0_181 = arith.constant 0 : index
      %c128_182 = arith.constant 128 : index
      %367 = vector.load %arg10[%c0_180, %c0_181, %c128_182] : memref<1x8x320xf32, #tpu.memory_space<vmem>>, vector<1x8x64xf32>
      %368 = vector.shape_cast %367 : vector<1x8x64xf32> to vector<8x64xf32>
      %369 = vector.shape_cast %366 : vector<8x64xf32> to vector<1x8x64xf32>
      tpu.vector_store %arg10[%c0_180, %c0_181, %c128_182], %369 {strides = array<i32>} : memref<1x8x320xf32, #tpu.memory_space<vmem>>, vector<1x8x64xf32>,
      %c0_183 = arith.constant 0 : index
      %c0_184 = arith.constant 0 : index
      %c0_185 = arith.constant 0 : index
      %370 = vector.load %arg5[%c0_183, %c0_184, %c0_185] : memref<1x8x64xf32, #tpu.memory_space<vmem>>, vector<1x8x64xf32>
      %371 = vector.shape_cast %370 : vector<1x8x64xf32> to vector<8x64xf32>
      %c0_186 = arith.constant 0 : index
      %c0_187 = arith.constant 0 : index
      %c128_188 = arith.constant 128 : index
      %372 = vector.load %arg11[%c0_186, %c0_187, %c128_188] : memref<1x8x320xf32, #tpu.memory_space<vmem>>, vector<1x8x64xf32>
      %373 = vector.shape_cast %372 : vector<1x8x64xf32> to vector<8x64xf32>
      %374 = vector.shape_cast %371 : vector<8x64xf32> to vector<1x8x64xf32>
      tpu.vector_store %arg11[%c0_186, %c0_187, %c128_188], %374 {strides = array<i32>} : memref<1x8x320xf32, #tpu.memory_space<vmem>>, vector<1x8x64xf32>,
    } else {
    }
    %c0 = arith.constant 0 : index
    %c0_5 = arith.constant 0 : index
    %c0_6 = arith.constant 0 : index
    %13 = vector.load %arg3[%c0, %c0_5, %c0_6] : memref<1x8x64xf32, #tpu.memory_space<vmem>>, vector<1x8x64xf32>
    %14 = vector.shape_cast %13 : vector<1x8x64xf32> to vector<8x64xf32>
    %c0_7 = arith.constant 0 : index
    %c0_8 = arith.constant 0 : index
    %15 = vector.load %arg6[%c0_7, %c0_8] : memref<1x64xi32, #tpu.memory_space<vmem>>, vector<1x64xi32>
    %c0_9 = arith.constant 0 : index
    %c0_10 = arith.constant 0 : index
    %16 = vector.load %arg7[%c0_9, %c0_10] : memref<1x64xi32, #tpu.memory_space<vmem>>, vector<1x64xi32>
    %17 = arith.index_cast %arg1 : i32 to index
    %c0_11 = arith.constant 0 : index
    %c119 = arith.constant 119 : index
    %18 = vector.load %arg10[%17, %c0_11, %c119] : memref<1x8x320xf32, #tpu.memory_space<vmem>>, vector<1x8x64xf32>
    %19 = vector.shape_cast %18 : vector<1x8x64xf32> to vector<8x64xf32>
    %20 = arith.index_cast %arg1 : i32 to index
    %c0_12 = arith.constant 0 : index
    %c119_13 = arith.constant 119 : index
    %21 = vector.load %arg11[%20, %c0_12, %c119_13] : memref<1x8x320xf32, #tpu.memory_space<vmem>>, vector<1x8x64xf32>
    %22 = vector.shape_cast %21 : vector<1x8x64xf32> to vector<8x64xf32>
    %23 = arith.mulf %14, %19 : vector<8x64xf32>
    %cst = arith.constant dense<0.000000e+00> : vector<64xf32>
    %24 = vector.multi_reduction <add>, %23, %cst [0] : vector<8x64xf32> to vector<64xf32>
    %25 = vector.shape_cast %24 : vector<64xf32> to vector<1x64xf32>
    %26 = arith.index_cast %9 : i32 to index
    %c0_14 = arith.constant 0 : index
    %27 = memref.load %arg2[%26, %c0_14] : memref<2x9xf32, #tpu.memory_space<smem>>
    %28 = vector.broadcast %27 : f32 to vector<1x64xf32>
    %29 = arith.addf %25, %28 : vector<1x64xf32>
    %c1_i32_15 = arith.constant 1 : i32
    %30 = vector.broadcast %c1_i32_15 : i32 to vector<1x64xi32>
    %31 = arith.cmpi slt, %16, %30 : vector<1x64xi32>
    %c9_i32 = arith.constant 9 : i32
    %32 = vector.broadcast %c9_i32 : i32 to vector<1x64xi32>
    %33 = arith.cmpi sge, %16, %32 : vector<1x64xi32>
    %34 = arith.ori %31, %33 : vector<1x64xi1>
    %c1_i32_16 = arith.constant 1 : i32
    %35 = vector.broadcast %c1_i32_16 : i32 to vector<1x64xi32>
    %36 = arith.cmpi slt, %15, %35 : vector<1x64xi32>
    %37 = arith.ori %34, %36 : vector<1x64xi1>
    %c9_i32_17 = arith.constant 9 : i32
    %38 = vector.broadcast %c9_i32_17 : i32 to vector<1x64xi32>
    %39 = arith.cmpi sge, %15, %38 : vector<1x64xi32>
    %40 = arith.ori %37, %39 : vector<1x64xi1>
    %cst_18 = arith.constant 0xFF800000 : f32
    %41 = vector.broadcast %cst_18 : f32 to vector<1x64xf32>
    %42 = arith.select %40, %41, %29 : vector<1x64xi1>, vector<1x64xf32>
    %c0_19 = arith.constant 0 : index
    %c0_20 = arith.constant 0 : index
    %c0_21 = arith.constant 0 : index
    %43 = vector.load %arg8[%c0_19, %c0_20, %c0_21] : memref<1x9x64xf32, #tpu.memory_space<vmem>>, vector<1x1x64xf32>
    %44 = vector.shape_cast %43 : vector<1x1x64xf32> to vector<1x64xf32>
    %45 = vector.shape_cast %42 : vector<1x64xf32> to vector<1x1x64xf32>
    tpu.vector_store %arg8[%c0_19, %c0_20, %c0_21], %45 {strides = array<i32>} : memref<1x9x64xf32, #tpu.memory_space<vmem>>, vector<1x1x64xf32>,
    %cst_22 = arith.constant 0.000000e+00 : f32
    %46 = vector.broadcast %cst_22 : f32 to vector<8x64xf32>
    %47 = vector.shape_cast %34 : vector<1x64xi1> to vector<1x64xi1>
    %48 = vector.broadcast %47 : vector<1x64xi1> to vector<8x64xi1>
    %49 = arith.select %48, %46, %22 : vector<8x64xi1>, vector<8x64xf32>
    %c0_23 = arith.constant 0 : index
    %c0_24 = arith.constant 0 : index
    %c0_25 = arith.constant 0 : index
    %c0_26 = arith.constant 0 : index
    %50 = vector.load %arg9[%c0_23, %c0_24, %c0_25, %c0_26] : memref<1x9x8x64xf32, #tpu.memory_space<vmem>>, vector<1x1x8x64xf32>
    %51 = vector.shape_cast %50 : vector<1x1x8x64xf32> to vector<8x64xf32>
    %52 = vector.shape_cast %49 : vector<8x64xf32> to vector<1x1x8x64xf32>
    tpu.vector_store %arg9[%c0_23, %c0_24, %c0_25, %c0_26], %52 {strides = array<i32>} : memref<1x9x8x64xf32, #tpu.memory_space<vmem>>, vector<1x1x8x64xf32>,
    %53 = arith.index_cast %arg1 : i32 to index
    %c0_27 = arith.constant 0 : index
    %c120 = arith.constant 120 : index
    %54 = vector.load %arg10[%53, %c0_27, %c120] : memref<1x8x320xf32, #tpu.memory_space<vmem>>, vector<1x8x64xf32>
    %55 = vector.shape_cast %54 : vector<1x8x64xf32> to vector<8x64xf32>
    %56 = arith.index_cast %arg1 : i32 to index
    %c0_28 = arith.constant 0 : index
    %c120_29 = arith.constant 120 : index
    %57 = vector.load %arg11[%56, %c0_28, %c120_29] : memref<1x8x320xf32, #tpu.memory_space<vmem>>, vector<1x8x64xf32>
    %58 = vector.shape_cast %57 : vector<1x8x64xf32> to vector<8x64xf32>
    %59 = arith.mulf %14, %55 : vector<8x64xf32>
    %cst_30 = arith.constant dense<0.000000e+00> : vector<64xf32>
    %60 = vector.multi_reduction <add>, %59, %cst_30 [0] : vector<8x64xf32> to vector<64xf32>
    %61 = vector.shape_cast %60 : vector<64xf32> to vector<1x64xf32>
    %62 = arith.index_cast %9 : i32 to index
    %c1 = arith.constant 1 : index
    %63 = memref.load %arg2[%62, %c1] : memref<2x9xf32, #tpu.memory_space<smem>>
    %64 = vector.broadcast %63 : f32 to vector<1x64xf32>
    %65 = arith.addf %61, %64 : vector<1x64xf32>
    %c0_i32_31 = arith.constant 0 : i32
    %66 = vector.broadcast %c0_i32_31 : i32 to vector<1x64xi32>
    %67 = arith.cmpi slt, %16, %66 : vector<1x64xi32>
    %c8_i32 = arith.constant 8 : i32
    %68 = vector.broadcast %c8_i32 : i32 to vector<1x64xi32>
    %69 = arith.cmpi sge, %16, %68 : vector<1x64xi32>
    %70 = arith.ori %67, %69 : vector<1x64xi1>
    %c1_i32_32 = arith.constant 1 : i32
    %71 = vector.broadcast %c1_i32_32 : i32 to vector<1x64xi32>
    %72 = arith.cmpi slt, %15, %71 : vector<1x64xi32>
    %73 = arith.ori %70, %72 : vector<1x64xi1>
    %c9_i32_33 = arith.constant 9 : i32
    %74 = vector.broadcast %c9_i32_33 : i32 to vector<1x64xi32>
    %75 = arith.cmpi sge, %15, %74 : vector<1x64xi32>
    %76 = arith.ori %73, %75 : vector<1x64xi1>
    %cst_34 = arith.constant 0xFF800000 : f32
    %77 = vector.broadcast %cst_34 : f32 to vector<1x64xf32>
    %78 = arith.select %76, %77, %65 : vector<1x64xi1>, vector<1x64xf32>
    %c0_35 = arith.constant 0 : index
    %c1_36 = arith.constant 1 : index
    %c0_37 = arith.constant 0 : index
    %79 = vector.load %arg8[%c0_35, %c1_36, %c0_37] : memref<1x9x64xf32, #tpu.memory_space<vmem>>, vector<1x1x64xf32>
    %80 = vector.shape_cast %79 : vector<1x1x64xf32> to vector<1x64xf32>
    %81 = vector.shape_cast %78 : vector<1x64xf32> to vector<1x1x64xf32>
    tpu.vector_store %arg8[%c0_35, %c1_36, %c0_37], %81 {strides = array<i32>} : memref<1x9x64xf32, #tpu.memory_space<vmem>>, vector<1x1x64xf32>,
    %cst_38 = arith.constant 0.000000e+00 : f32
    %82 = vector.broadcast %cst_38 : f32 to vector<8x64xf32>
    %83 = vector.shape_cast %70 : vector<1x64xi1> to vector<1x64xi1>
    %84 = vector.broadcast %83 : vector<1x64xi1> to vector<8x64xi1>
    %85 = arith.select %84, %82, %58 : vector<8x64xi1>, vector<8x64xf32>
    %c0_39 = arith.constant 0 : index
    %c1_40 = arith.constant 1 : index
    %c0_41 = arith.constant 0 : index
    %c0_42 = arith.constant 0 : index
    %86 = vector.load %arg9[%c0_39, %c1_40, %c0_41, %c0_42] : memref<1x9x8x64xf32, #tpu.memory_space<vmem>>, vector<1x1x8x64xf32>
    %87 = vector.shape_cast %86 : vector<1x1x8x64xf32> to vector<8x64xf32>
    %88 = vector.shape_cast %85 : vector<8x64xf32> to vector<1x1x8x64xf32>
    tpu.vector_store %arg9[%c0_39, %c1_40, %c0_41, %c0_42], %88 {strides = array<i32>} : memref<1x9x8x64xf32, #tpu.memory_space<vmem>>, vector<1x1x8x64xf32>,
    %89 = arith.index_cast %arg1 : i32 to index
    %c0_43 = arith.constant 0 : index
    %c121 = arith.constant 121 : index
    %90 = vector.load %arg10[%89, %c0_43, %c121] : memref<1x8x320xf32, #tpu.memory_space<vmem>>, vector<1x8x64xf32>
    %91 = vector.shape_cast %90 : vector<1x8x64xf32> to vector<8x64xf32>
    %92 = arith.index_cast %arg1 : i32 to index
    %c0_44 = arith.constant 0 : index
    %c121_45 = arith.constant 121 : index
    %93 = vector.load %arg11[%92, %c0_44, %c121_45] : memref<1x8x320xf32, #tpu.memory_space<vmem>>, vector<1x8x64xf32>
    %94 = vector.shape_cast %93 : vector<1x8x64xf32> to vector<8x64xf32>
    %95 = arith.mulf %14, %91 : vector<8x64xf32>
    %cst_46 = arith.constant dense<0.000000e+00> : vector<64xf32>
    %96 = vector.multi_reduction <add>, %95, %cst_46 [0] : vector<8x64xf32> to vector<64xf32>
    %97 = vector.shape_cast %96 : vector<64xf32> to vector<1x64xf32>
    %98 = arith.index_cast %9 : i32 to index
    %c2 = arith.constant 2 : index
    %99 = memref.load %arg2[%98, %c2] : memref<2x9xf32, #tpu.memory_space<smem>>
    %100 = vector.broadcast %99 : f32 to vector<1x64xf32>
    %101 = arith.addf %97, %100 : vector<1x64xf32>
    %c-1_i32 = arith.constant -1 : i32
    %102 = vector.broadcast %c-1_i32 : i32 to vector<1x64xi32>
    %103 = arith.cmpi slt, %16, %102 : vector<1x64xi32>
    %c7_i32 = arith.constant 7 : i32
    %104 = vector.broadcast %c7_i32 : i32 to vector<1x64xi32>
    %105 = arith.cmpi sge, %16, %104 : vector<1x64xi32>
    %106 = arith.ori %103, %105 : vector<1x64xi1>
    %c1_i32_47 = arith.constant 1 : i32
    %107 = vector.broadcast %c1_i32_47 : i32 to vector<1x64xi32>
    %108 = arith.cmpi slt, %15, %107 : vector<1x64xi32>
    %109 = arith.ori %106, %108 : vector<1x64xi1>
    %c9_i32_48 = arith.constant 9 : i32
    %110 = vector.broadcast %c9_i32_48 : i32 to vector<1x64xi32>
    %111 = arith.cmpi sge, %15, %110 : vector<1x64xi32>
    %112 = arith.ori %109, %111 : vector<1x64xi1>
    %cst_49 = arith.constant 0xFF800000 : f32
    %113 = vector.broadcast %cst_49 : f32 to vector<1x64xf32>
    %114 = arith.select %112, %113, %101 : vector<1x64xi1>, vector<1x64xf32>
    %c0_50 = arith.constant 0 : index
    %c2_51 = arith.constant 2 : index
    %c0_52 = arith.constant 0 : index
    %115 = vector.load %arg8[%c0_50, %c2_51, %c0_52] : memref<1x9x64xf32, #tpu.memory_space<vmem>>, vector<1x1x64xf32>
    %116 = vector.shape_cast %115 : vector<1x1x64xf32> to vector<1x64xf32>
    %117 = vector.shape_cast %114 : vector<1x64xf32> to vector<1x1x64xf32>
    tpu.vector_store %arg8[%c0_50, %c2_51, %c0_52], %117 {strides = array<i32>} : memref<1x9x64xf32, #tpu.memory_space<vmem>>, vector<1x1x64xf32>,
    %cst_53 = arith.constant 0.000000e+00 : f32
    %118 = vector.broadcast %cst_53 : f32 to vector<8x64xf32>
    %119 = vector.shape_cast %106 : vector<1x64xi1> to vector<1x64xi1>
    %120 = vector.broadcast %119 : vector<1x64xi1> to vector<8x64xi1>
    %121 = arith.select %120, %118, %94 : vector<8x64xi1>, vector<8x64xf32>
    %c0_54 = arith.constant 0 : index
    %c2_55 = arith.constant 2 : index
    %c0_56 = arith.constant 0 : index
    %c0_57 = arith.constant 0 : index
    %122 = vector.load %arg9[%c0_54, %c2_55, %c0_56, %c0_57] : memref<1x9x8x64xf32, #tpu.memory_space<vmem>>, vector<1x1x8x64xf32>
    %123 = vector.shape_cast %122 : vector<1x1x8x64xf32> to vector<8x64xf32>
    %124 = vector.shape_cast %121 : vector<8x64xf32> to vector<1x1x8x64xf32>
    tpu.vector_store %arg9[%c0_54, %c2_55, %c0_56, %c0_57], %124 {strides = array<i32>} : memref<1x9x8x64xf32, #tpu.memory_space<vmem>>, vector<1x1x8x64xf32>,
    %125 = arith.index_cast %arg1 : i32 to index
    %c0_58 = arith.constant 0 : index
    %c127 = arith.constant 127 : index
    %126 = vector.load %arg10[%125, %c0_58, %c127] : memref<1x8x320xf32, #tpu.memory_space<vmem>>, vector<1x8x64xf32>
    %127 = vector.shape_cast %126 : vector<1x8x64xf32> to vector<8x64xf32>
    %128 = arith.index_cast %arg1 : i32 to index
    %c0_59 = arith.constant 0 : index
    %c127_60 = arith.constant 127 : index
    %129 = vector.load %arg11[%128, %c0_59, %c127_60] : memref<1x8x320xf32, #tpu.memory_space<vmem>>, vector<1x8x64xf32>
    %130 = vector.shape_cast %129 : vector<1x8x64xf32> to vector<8x64xf32>
    %131 = arith.mulf %14, %127 : vector<8x64xf32>
    %cst_61 = arith.constant dense<0.000000e+00> : vector<64xf32>
    %132 = vector.multi_reduction <add>, %131, %cst_61 [0] : vector<8x64xf32> to vector<64xf32>
    %133 = vector.shape_cast %132 : vector<64xf32> to vector<1x64xf32>
    %134 = arith.index_cast %9 : i32 to index
    %c3 = arith.constant 3 : index
    %135 = memref.load %arg2[%134, %c3] : memref<2x9xf32, #tpu.memory_space<smem>>
    %136 = vector.broadcast %135 : f32 to vector<1x64xf32>
    %137 = arith.addf %133, %136 : vector<1x64xf32>
    %c1_i32_62 = arith.constant 1 : i32
    %138 = vector.broadcast %c1_i32_62 : i32 to vector<1x64xi32>
    %139 = arith.cmpi slt, %16, %138 : vector<1x64xi32>
    %c9_i32_63 = arith.constant 9 : i32
    %140 = vector.broadcast %c9_i32_63 : i32 to vector<1x64xi32>
    %141 = arith.cmpi sge, %16, %140 : vector<1x64xi32>
    %142 = arith.ori %139, %141 : vector<1x64xi1>
    %c0_i32_64 = arith.constant 0 : i32
    %143 = vector.broadcast %c0_i32_64 : i32 to vector<1x64xi32>
    %144 = arith.cmpi slt, %15, %143 : vector<1x64xi32>
    %145 = arith.ori %142, %144 : vector<1x64xi1>
    %c8_i32_65 = arith.constant 8 : i32
    %146 = vector.broadcast %c8_i32_65 : i32 to vector<1x64xi32>
    %147 = arith.cmpi sge, %15, %146 : vector<1x64xi32>
    %148 = arith.ori %145, %147 : vector<1x64xi1>
    %cst_66 = arith.constant 0xFF800000 : f32
    %149 = vector.broadcast %cst_66 : f32 to vector<1x64xf32>
    %150 = arith.select %148, %149, %137 : vector<1x64xi1>, vector<1x64xf32>
    %c0_67 = arith.constant 0 : index
    %c3_68 = arith.constant 3 : index
    %c0_69 = arith.constant 0 : index
    %151 = vector.load %arg8[%c0_67, %c3_68, %c0_69] : memref<1x9x64xf32, #tpu.memory_space<vmem>>, vector<1x1x64xf32>
    %152 = vector.shape_cast %151 : vector<1x1x64xf32> to vector<1x64xf32>
    %153 = vector.shape_cast %150 : vector<1x64xf32> to vector<1x1x64xf32>
    tpu.vector_store %arg8[%c0_67, %c3_68, %c0_69], %153 {strides = array<i32>} : memref<1x9x64xf32, #tpu.memory_space<vmem>>, vector<1x1x64xf32>,
    %cst_70 = arith.constant 0.000000e+00 : f32
    %154 = vector.broadcast %cst_70 : f32 to vector<8x64xf32>
    %155 = vector.shape_cast %142 : vector<1x64xi1> to vector<1x64xi1>
    %156 = vector.broadcast %155 : vector<1x64xi1> to vector<8x64xi1>
    %157 = arith.select %156, %154, %130 : vector<8x64xi1>, vector<8x64xf32>
    %c0_71 = arith.constant 0 : index
    %c3_72 = arith.constant 3 : index
    %c0_73 = arith.constant 0 : index
    %c0_74 = arith.constant 0 : index
    %158 = vector.load %arg9[%c0_71, %c3_72, %c0_73, %c0_74] : memref<1x9x8x64xf32, #tpu.memory_space<vmem>>, vector<1x1x8x64xf32>
    %159 = vector.shape_cast %158 : vector<1x1x8x64xf32> to vector<8x64xf32>
    %160 = vector.shape_cast %157 : vector<8x64xf32> to vector<1x1x8x64xf32>
    tpu.vector_store %arg9[%c0_71, %c3_72, %c0_73, %c0_74], %160 {strides = array<i32>} : memref<1x9x8x64xf32, #tpu.memory_space<vmem>>, vector<1x1x8x64xf32>,
    %161 = arith.index_cast %arg1 : i32 to index
    %c0_75 = arith.constant 0 : index
    %c128 = arith.constant 128 : index
    %162 = vector.load %arg10[%161, %c0_75, %c128] : memref<1x8x320xf32, #tpu.memory_space<vmem>>, vector<1x8x64xf32>
    %163 = vector.shape_cast %162 : vector<1x8x64xf32> to vector<8x64xf32>
    %164 = arith.index_cast %arg1 : i32 to index
    %c0_76 = arith.constant 0 : index
    %c128_77 = arith.constant 128 : index
    %165 = vector.load %arg11[%164, %c0_76, %c128_77] : memref<1x8x320xf32, #tpu.memory_space<vmem>>, vector<1x8x64xf32>
    %166 = vector.shape_cast %165 : vector<1x8x64xf32> to vector<8x64xf32>
    %167 = arith.mulf %14, %163 : vector<8x64xf32>
    %cst_78 = arith.constant dense<0.000000e+00> : vector<64xf32>
    %168 = vector.multi_reduction <add>, %167, %cst_78 [0] : vector<8x64xf32> to vector<64xf32>
    %169 = vector.shape_cast %168 : vector<64xf32> to vector<1x64xf32>
    %170 = arith.index_cast %9 : i32 to index
    %c4 = arith.constant 4 : index
    %171 = memref.load %arg2[%170, %c4] : memref<2x9xf32, #tpu.memory_space<smem>>
    %172 = vector.broadcast %171 : f32 to vector<1x64xf32>
    %173 = arith.addf %169, %172 : vector<1x64xf32>
    %c0_i32_79 = arith.constant 0 : i32
    %174 = vector.broadcast %c0_i32_79 : i32 to vector<1x64xi32>
    %175 = arith.cmpi slt, %16, %174 : vector<1x64xi32>
    %c8_i32_80 = arith.constant 8 : i32
    %176 = vector.broadcast %c8_i32_80 : i32 to vector<1x64xi32>
    %177 = arith.cmpi sge, %16, %176 : vector<1x64xi32>
    %178 = arith.ori %175, %177 : vector<1x64xi1>
    %c0_i32_81 = arith.constant 0 : i32
    %179 = vector.broadcast %c0_i32_81 : i32 to vector<1x64xi32>
    %180 = arith.cmpi slt, %15, %179 : vector<1x64xi32>
    %181 = arith.ori %178, %180 : vector<1x64xi1>
    %c8_i32_82 = arith.constant 8 : i32
    %182 = vector.broadcast %c8_i32_82 : i32 to vector<1x64xi32>
    %183 = arith.cmpi sge, %15, %182 : vector<1x64xi32>
    %184 = arith.ori %181, %183 : vector<1x64xi1>
    %cst_83 = arith.constant 0xFF800000 : f32
    %185 = vector.broadcast %cst_83 : f32 to vector<1x64xf32>
    %186 = arith.select %184, %185, %173 : vector<1x64xi1>, vector<1x64xf32>
    %c0_84 = arith.constant 0 : index
    %c4_85 = arith.constant 4 : index
    %c0_86 = arith.constant 0 : index
    %187 = vector.load %arg8[%c0_84, %c4_85, %c0_86] : memref<1x9x64xf32, #tpu.memory_space<vmem>>, vector<1x1x64xf32>
    %188 = vector.shape_cast %187 : vector<1x1x64xf32> to vector<1x64xf32>
    %189 = vector.shape_cast %186 : vector<1x64xf32> to vector<1x1x64xf32>
    tpu.vector_store %arg8[%c0_84, %c4_85, %c0_86], %189 {strides = array<i32>} : memref<1x9x64xf32, #tpu.memory_space<vmem>>, vector<1x1x64xf32>,
    %cst_87 = arith.constant 0.000000e+00 : f32
    %190 = vector.broadcast %cst_87 : f32 to vector<8x64xf32>
    %191 = vector.shape_cast %178 : vector<1x64xi1> to vector<1x64xi1>
    %192 = vector.broadcast %191 : vector<1x64xi1> to vector<8x64xi1>
    %193 = arith.select %192, %190, %166 : vector<8x64xi1>, vector<8x64xf32>
    %c0_88 = arith.constant 0 : index
    %c4_89 = arith.constant 4 : index
    %c0_90 = arith.constant 0 : index
    %c0_91 = arith.constant 0 : index
    %194 = vector.load %arg9[%c0_88, %c4_89, %c0_90, %c0_91] : memref<1x9x8x64xf32, #tpu.memory_space<vmem>>, vector<1x1x8x64xf32>
    %195 = vector.shape_cast %194 : vector<1x1x8x64xf32> to vector<8x64xf32>
    %196 = vector.shape_cast %193 : vector<8x64xf32> to vector<1x1x8x64xf32>
    tpu.vector_store %arg9[%c0_88, %c4_89, %c0_90, %c0_91], %196 {strides = array<i32>} : memref<1x9x8x64xf32, #tpu.memory_space<vmem>>, vector<1x1x8x64xf32>,
    %197 = arith.index_cast %arg1 : i32 to index
    %c0_92 = arith.constant 0 : index
    %c129 = arith.constant 129 : index
    %198 = vector.load %arg10[%197, %c0_92, %c129] : memref<1x8x320xf32, #tpu.memory_space<vmem>>, vector<1x8x64xf32>
    %199 = vector.shape_cast %198 : vector<1x8x64xf32> to vector<8x64xf32>
    %200 = arith.index_cast %arg1 : i32 to index
    %c0_93 = arith.constant 0 : index
    %c129_94 = arith.constant 129 : index
    %201 = vector.load %arg11[%200, %c0_93, %c129_94] : memref<1x8x320xf32, #tpu.memory_space<vmem>>, vector<1x8x64xf32>
    %202 = vector.shape_cast %201 : vector<1x8x64xf32> to vector<8x64xf32>
    %203 = arith.mulf %14, %199 : vector<8x64xf32>
    %cst_95 = arith.constant dense<0.000000e+00> : vector<64xf32>
    %204 = vector.multi_reduction <add>, %203, %cst_95 [0] : vector<8x64xf32> to vector<64xf32>
    %205 = vector.shape_cast %204 : vector<64xf32> to vector<1x64xf32>
    %206 = arith.index_cast %9 : i32 to index
    %c5 = arith.constant 5 : index
    %207 = memref.load %arg2[%206, %c5] : memref<2x9xf32, #tpu.memory_space<smem>>
    %208 = vector.broadcast %207 : f32 to vector<1x64xf32>
    %209 = arith.addf %205, %208 : vector<1x64xf32>
    %c-1_i32_96 = arith.constant -1 : i32
    %210 = vector.broadcast %c-1_i32_96 : i32 to vector<1x64xi32>
    %211 = arith.cmpi slt, %16, %210 : vector<1x64xi32>
    %c7_i32_97 = arith.constant 7 : i32
    %212 = vector.broadcast %c7_i32_97 : i32 to vector<1x64xi32>
    %213 = arith.cmpi sge, %16, %212 : vector<1x64xi32>
    %214 = arith.ori %211, %213 : vector<1x64xi1>
    %c0_i32_98 = arith.constant 0 : i32
    %215 = vector.broadcast %c0_i32_98 : i32 to vector<1x64xi32>
    %216 = arith.cmpi slt, %15, %215 : vector<1x64xi32>
    %217 = arith.ori %214, %216 : vector<1x64xi1>
    %c8_i32_99 = arith.constant 8 : i32
    %218 = vector.broadcast %c8_i32_99 : i32 to vector<1x64xi32>
    %219 = arith.cmpi sge, %15, %218 : vector<1x64xi32>
    %220 = arith.ori %217, %219 : vector<1x64xi1>
    %cst_100 = arith.constant 0xFF800000 : f32
    %221 = vector.broadcast %cst_100 : f32 to vector<1x64xf32>
    %222 = arith.select %220, %221, %209 : vector<1x64xi1>, vector<1x64xf32>
    %c0_101 = arith.constant 0 : index
    %c5_102 = arith.constant 5 : index
    %c0_103 = arith.constant 0 : index
    %223 = vector.load %arg8[%c0_101, %c5_102, %c0_103] : memref<1x9x64xf32, #tpu.memory_space<vmem>>, vector<1x1x64xf32>
    %224 = vector.shape_cast %223 : vector<1x1x64xf32> to vector<1x64xf32>
    %225 = vector.shape_cast %222 : vector<1x64xf32> to vector<1x1x64xf32>
    tpu.vector_store %arg8[%c0_101, %c5_102, %c0_103], %225 {strides = array<i32>} : memref<1x9x64xf32, #tpu.memory_space<vmem>>, vector<1x1x64xf32>,
    %cst_104 = arith.constant 0.000000e+00 : f32
    %226 = vector.broadcast %cst_104 : f32 to vector<8x64xf32>
    %227 = vector.shape_cast %214 : vector<1x64xi1> to vector<1x64xi1>
    %228 = vector.broadcast %227 : vector<1x64xi1> to vector<8x64xi1>
    %229 = arith.select %228, %226, %202 : vector<8x64xi1>, vector<8x64xf32>
    %c0_105 = arith.constant 0 : index
    %c5_106 = arith.constant 5 : index
    %c0_107 = arith.constant 0 : index
    %c0_108 = arith.constant 0 : index
    %230 = vector.load %arg9[%c0_105, %c5_106, %c0_107, %c0_108] : memref<1x9x8x64xf32, #tpu.memory_space<vmem>>, vector<1x1x8x64xf32>
    %231 = vector.shape_cast %230 : vector<1x1x8x64xf32> to vector<8x64xf32>
    %232 = vector.shape_cast %229 : vector<8x64xf32> to vector<1x1x8x64xf32>
    tpu.vector_store %arg9[%c0_105, %c5_106, %c0_107, %c0_108], %232 {strides = array<i32>} : memref<1x9x8x64xf32, #tpu.memory_space<vmem>>, vector<1x1x8x64xf32>,
    %233 = arith.index_cast %arg1 : i32 to index
    %c0_109 = arith.constant 0 : index
    %c135 = arith.constant 135 : index
    %234 = vector.load %arg10[%233, %c0_109, %c135] : memref<1x8x320xf32, #tpu.memory_space<vmem>>, vector<1x8x64xf32>
    %235 = vector.shape_cast %234 : vector<1x8x64xf32> to vector<8x64xf32>
    %236 = arith.index_cast %arg1 : i32 to index
    %c0_110 = arith.constant 0 : index
    %c135_111 = arith.constant 135 : index
    %237 = vector.load %arg11[%236, %c0_110, %c135_111] : memref<1x8x320xf32, #tpu.memory_space<vmem>>, vector<1x8x64xf32>
    %238 = vector.shape_cast %237 : vector<1x8x64xf32> to vector<8x64xf32>
    %239 = arith.mulf %14, %235 : vector<8x64xf32>
    %cst_112 = arith.constant dense<0.000000e+00> : vector<64xf32>
    %240 = vector.multi_reduction <add>, %239, %cst_112 [0] : vector<8x64xf32> to vector<64xf32>
    %241 = vector.shape_cast %240 : vector<64xf32> to vector<1x64xf32>
    %242 = arith.index_cast %9 : i32 to index
    %c6 = arith.constant 6 : index
    %243 = memref.load %arg2[%242, %c6] : memref<2x9xf32, #tpu.memory_space<smem>>
    %244 = vector.broadcast %243 : f32 to vector<1x64xf32>
    %245 = arith.addf %241, %244 : vector<1x64xf32>
    %c1_i32_113 = arith.constant 1 : i32
    %246 = vector.broadcast %c1_i32_113 : i32 to vector<1x64xi32>
    %247 = arith.cmpi slt, %16, %246 : vector<1x64xi32>
    %c9_i32_114 = arith.constant 9 : i32
    %248 = vector.broadcast %c9_i32_114 : i32 to vector<1x64xi32>
    %249 = arith.cmpi sge, %16, %248 : vector<1x64xi32>
    %250 = arith.ori %247, %249 : vector<1x64xi1>
    %c-1_i32_115 = arith.constant -1 : i32
    %251 = vector.broadcast %c-1_i32_115 : i32 to vector<1x64xi32>
    %252 = arith.cmpi slt, %15, %251 : vector<1x64xi32>
    %253 = arith.ori %250, %252 : vector<1x64xi1>
    %c7_i32_116 = arith.constant 7 : i32
    %254 = vector.broadcast %c7_i32_116 : i32 to vector<1x64xi32>
    %255 = arith.cmpi sge, %15, %254 : vector<1x64xi32>
    %256 = arith.ori %253, %255 : vector<1x64xi1>
    %cst_117 = arith.constant 0xFF800000 : f32
    %257 = vector.broadcast %cst_117 : f32 to vector<1x64xf32>
    %258 = arith.select %256, %257, %245 : vector<1x64xi1>, vector<1x64xf32>
    %c0_118 = arith.constant 0 : index
    %c6_119 = arith.constant 6 : index
    %c0_120 = arith.constant 0 : index
    %259 = vector.load %arg8[%c0_118, %c6_119, %c0_120] : memref<1x9x64xf32, #tpu.memory_space<vmem>>, vector<1x1x64xf32>
    %260 = vector.shape_cast %259 : vector<1x1x64xf32> to vector<1x64xf32>
    %261 = vector.shape_cast %258 : vector<1x64xf32> to vector<1x1x64xf32>
    tpu.vector_store %arg8[%c0_118, %c6_119, %c0_120], %261 {strides = array<i32>} : memref<1x9x64xf32, #tpu.memory_space<vmem>>, vector<1x1x64xf32>,
    %cst_121 = arith.constant 0.000000e+00 : f32
    %262 = vector.broadcast %cst_121 : f32 to vector<8x64xf32>
    %263 = vector.shape_cast %250 : vector<1x64xi1> to vector<1x64xi1>
    %264 = vector.broadcast %263 : vector<1x64xi1> to vector<8x64xi1>
    %265 = arith.select %264, %262, %238 : vector<8x64xi1>, vector<8x64xf32>
    %c0_122 = arith.constant 0 : index
    %c6_123 = arith.constant 6 : index
    %c0_124 = arith.constant 0 : index
    %c0_125 = arith.constant 0 : index
    %266 = vector.load %arg9[%c0_122, %c6_123, %c0_124, %c0_125] : memref<1x9x8x64xf32, #tpu.memory_space<vmem>>, vector<1x1x8x64xf32>
    %267 = vector.shape_cast %266 : vector<1x1x8x64xf32> to vector<8x64xf32>
    %268 = vector.shape_cast %265 : vector<8x64xf32> to vector<1x1x8x64xf32>
    tpu.vector_store %arg9[%c0_122, %c6_123, %c0_124, %c0_125], %268 {strides = array<i32>} : memref<1x9x8x64xf32, #tpu.memory_space<vmem>>, vector<1x1x8x64xf32>,
    %269 = arith.index_cast %arg1 : i32 to index
    %c0_126 = arith.constant 0 : index
    %c136 = arith.constant 136 : index
    %270 = vector.load %arg10[%269, %c0_126, %c136] : memref<1x8x320xf32, #tpu.memory_space<vmem>>, vector<1x8x64xf32>
    %271 = vector.shape_cast %270 : vector<1x8x64xf32> to vector<8x64xf32>
    %272 = arith.index_cast %arg1 : i32 to index
    %c0_127 = arith.constant 0 : index
    %c136_128 = arith.constant 136 : index
    %273 = vector.load %arg11[%272, %c0_127, %c136_128] : memref<1x8x320xf32, #tpu.memory_space<vmem>>, vector<1x8x64xf32>
    %274 = vector.shape_cast %273 : vector<1x8x64xf32> to vector<8x64xf32>
    %275 = arith.mulf %14, %271 : vector<8x64xf32>
    %cst_129 = arith.constant dense<0.000000e+00> : vector<64xf32>
    %276 = vector.multi_reduction <add>, %275, %cst_129 [0] : vector<8x64xf32> to vector<64xf32>
    %277 = vector.shape_cast %276 : vector<64xf32> to vector<1x64xf32>
    %278 = arith.index_cast %9 : i32 to index
    %c7 = arith.constant 7 : index
    %279 = memref.load %arg2[%278, %c7] : memref<2x9xf32, #tpu.memory_space<smem>>
    %280 = vector.broadcast %279 : f32 to vector<1x64xf32>
    %281 = arith.addf %277, %280 : vector<1x64xf32>
    %c0_i32_130 = arith.constant 0 : i32
    %282 = vector.broadcast %c0_i32_130 : i32 to vector<1x64xi32>
    %283 = arith.cmpi slt, %16, %282 : vector<1x64xi32>
    %c8_i32_131 = arith.constant 8 : i32
    %284 = vector.broadcast %c8_i32_131 : i32 to vector<1x64xi32>
    %285 = arith.cmpi sge, %16, %284 : vector<1x64xi32>
    %286 = arith.ori %283, %285 : vector<1x64xi1>
    %c-1_i32_132 = arith.constant -1 : i32
    %287 = vector.broadcast %c-1_i32_132 : i32 to vector<1x64xi32>
    %288 = arith.cmpi slt, %15, %287 : vector<1x64xi32>
    %289 = arith.ori %286, %288 : vector<1x64xi1>
    %c7_i32_133 = arith.constant 7 : i32
    %290 = vector.broadcast %c7_i32_133 : i32 to vector<1x64xi32>
    %291 = arith.cmpi sge, %15, %290 : vector<1x64xi32>
    %292 = arith.ori %289, %291 : vector<1x64xi1>
    %cst_134 = arith.constant 0xFF800000 : f32
    %293 = vector.broadcast %cst_134 : f32 to vector<1x64xf32>
    %294 = arith.select %292, %293, %281 : vector<1x64xi1>, vector<1x64xf32>
    %c0_135 = arith.constant 0 : index
    %c7_136 = arith.constant 7 : index
    %c0_137 = arith.constant 0 : index
    %295 = vector.load %arg8[%c0_135, %c7_136, %c0_137] : memref<1x9x64xf32, #tpu.memory_space<vmem>>, vector<1x1x64xf32>
    %296 = vector.shape_cast %295 : vector<1x1x64xf32> to vector<1x64xf32>
    %297 = vector.shape_cast %294 : vector<1x64xf32> to vector<1x1x64xf32>
    tpu.vector_store %arg8[%c0_135, %c7_136, %c0_137], %297 {strides = array<i32>} : memref<1x9x64xf32, #tpu.memory_space<vmem>>, vector<1x1x64xf32>,
    %cst_138 = arith.constant 0.000000e+00 : f32
    %298 = vector.broadcast %cst_138 : f32 to vector<8x64xf32>
    %299 = vector.shape_cast %286 : vector<1x64xi1> to vector<1x64xi1>
    %300 = vector.broadcast %299 : vector<1x64xi1> to vector<8x64xi1>
    %301 = arith.select %300, %298, %274 : vector<8x64xi1>, vector<8x64xf32>
    %c0_139 = arith.constant 0 : index
    %c7_140 = arith.constant 7 : index
    %c0_141 = arith.constant 0 : index
    %c0_142 = arith.constant 0 : index
    %302 = vector.load %arg9[%c0_139, %c7_140, %c0_141, %c0_142] : memref<1x9x8x64xf32, #tpu.memory_space<vmem>>, vector<1x1x8x64xf32>
    %303 = vector.shape_cast %302 : vector<1x1x8x64xf32> to vector<8x64xf32>
    %304 = vector.shape_cast %301 : vector<8x64xf32> to vector<1x1x8x64xf32>
    tpu.vector_store %arg9[%c0_139, %c7_140, %c0_141, %c0_142], %304 {strides = array<i32>} : memref<1x9x8x64xf32, #tpu.memory_space<vmem>>, vector<1x1x8x64xf32>,
    %305 = arith.index_cast %arg1 : i32 to index
    %c0_143 = arith.constant 0 : index
    %c137 = arith.constant 137 : index
    %306 = vector.load %arg10[%305, %c0_143, %c137] : memref<1x8x320xf32, #tpu.memory_space<vmem>>, vector<1x8x64xf32>
    %307 = vector.shape_cast %306 : vector<1x8x64xf32> to vector<8x64xf32>
    %308 = arith.index_cast %arg1 : i32 to index
    %c0_144 = arith.constant 0 : index
    %c137_145 = arith.constant 137 : index
    %309 = vector.load %arg11[%308, %c0_144, %c137_145] : memref<1x8x320xf32, #tpu.memory_space<vmem>>, vector<1x8x64xf32>
    %310 = vector.shape_cast %309 : vector<1x8x64xf32> to vector<8x64xf32>
    %311 = arith.mulf %14, %307 : vector<8x64xf32>
    %cst_146 = arith.constant dense<0.000000e+00> : vector<64xf32>
    %312 = vector.multi_reduction <add>, %311, %cst_146 [0] : vector<8x64xf32> to vector<64xf32>
    %313 = vector.shape_cast %312 : vector<64xf32> to vector<1x64xf32>
    %314 = arith.index_cast %9 : i32 to index
    %c8 = arith.constant 8 : index
    %315 = memref.load %arg2[%314, %c8] : memref<2x9xf32, #tpu.memory_space<smem>>
    %316 = vector.broadcast %315 : f32 to vector<1x64xf32>
    %317 = arith.addf %313, %316 : vector<1x64xf32>
    %c-1_i32_147 = arith.constant -1 : i32
    %318 = vector.broadcast %c-1_i32_147 : i32 to vector<1x64xi32>
    %319 = arith.cmpi slt, %16, %318 : vector<1x64xi32>
    %c7_i32_148 = arith.constant 7 : i32
    %320 = vector.broadcast %c7_i32_148 : i32 to vector<1x64xi32>
    %321 = arith.cmpi sge, %16, %320 : vector<1x64xi32>
    %322 = arith.ori %319, %321 : vector<1x64xi1>
    %c-1_i32_149 = arith.constant -1 : i32
    %323 = vector.broadcast %c-1_i32_149 : i32 to vector<1x64xi32>
    %324 = arith.cmpi slt, %15, %323 : vector<1x64xi32>
    %325 = arith.ori %322, %324 : vector<1x64xi1>
    %c7_i32_150 = arith.constant 7 : i32
    %326 = vector.broadcast %c7_i32_150 : i32 to vector<1x64xi32>
    %327 = arith.cmpi sge, %15, %326 : vector<1x64xi32>
    %328 = arith.ori %325, %327 : vector<1x64xi1>
    %cst_151 = arith.constant 0xFF800000 : f32
    %329 = vector.broadcast %cst_151 : f32 to vector<1x64xf32>
    %330 = arith.select %328, %329, %317 : vector<1x64xi1>, vector<1x64xf32>
    %c0_152 = arith.constant 0 : index
    %c8_153 = arith.constant 8 : index
    %c0_154 = arith.constant 0 : index
    %331 = vector.load %arg8[%c0_152, %c8_153, %c0_154] : memref<1x9x64xf32, #tpu.memory_space<vmem>>, vector<1x1x64xf32>
    %332 = vector.shape_cast %331 : vector<1x1x64xf32> to vector<1x64xf32>
    %333 = vector.shape_cast %330 : vector<1x64xf32> to vector<1x1x64xf32>
    tpu.vector_store %arg8[%c0_152, %c8_153, %c0_154], %333 {strides = array<i32>} : memref<1x9x64xf32, #tpu.memory_space<vmem>>, vector<1x1x64xf32>,
    %cst_155 = arith.constant 0.000000e+00 : f32
    %334 = vector.broadcast %cst_155 : f32 to vector<8x64xf32>
    %335 = vector.shape_cast %322 : vector<1x64xi1> to vector<1x64xi1>
    %336 = vector.broadcast %335 : vector<1x64xi1> to vector<8x64xi1>
    %337 = arith.select %336, %334, %310 : vector<8x64xi1>, vector<8x64xf32>
    %c0_156 = arith.constant 0 : index
    %c8_157 = arith.constant 8 : index
    %c0_158 = arith.constant 0 : index
    %c0_159 = arith.constant 0 : index
    %338 = vector.load %arg9[%c0_156, %c8_157, %c0_158, %c0_159] : memref<1x9x8x64xf32, #tpu.memory_space<vmem>>, vector<1x1x8x64xf32>
    %339 = vector.shape_cast %338 : vector<1x1x8x64xf32> to vector<8x64xf32>
    %340 = vector.shape_cast %337 : vector<8x64xf32> to vector<1x1x8x64xf32>
    tpu.vector_store %arg9[%c0_156, %c8_157, %c0_158, %c0_159], %340 {strides = array<i32>} : memref<1x9x8x64xf32, #tpu.memory_space<vmem>>, vector<1x1x8x64xf32>,
    return
  }
  func.func @transform_0(%arg0: i32, %arg1: i32) -> (i32, i32) {
    %c0_i32 = arith.constant 0 : i32
    %c0_i32_0 = arith.constant 0 : i32
    %c0_i32_1 = arith.constant 0 : i32
    return %c0_i32, %c0_i32_0 : i32, i32
  }
  func.func @transform_1(%arg0: i32, %arg1: i32) -> (i32, i32, i32) {
    %c0_i32 = arith.constant 0 : i32
    %c0_i32_0 = arith.constant 0 : i32
    return %arg0, %c0_i32, %arg1 : i32, i32, i32
  }
  func.func @transform_2(%arg0: i32, %arg1: i32) -> (i32, i32, i32) {
    %c0_i32 = arith.constant 0 : i32
    %c0_i32_0 = arith.constant 0 : i32
    %c0_i32_1 = arith.constant 0 : i32
    return %arg0, %c0_i32, %c0_i32_0 : i32, i32, i32
  }
  func.func @transform_3(%arg0: i32, %arg1: i32) -> (i32, i32, i32) {
    %c0_i32 = arith.constant 0 : i32
    %c0_i32_0 = arith.constant 0 : i32
    %c0_i32_1 = arith.constant 0 : i32
    return %arg0, %c0_i32, %c0_i32_0 : i32, i32, i32
  }
  func.func @transform_4(%arg0: i32, %arg1: i32) -> (i32, i32) {
    %c0_i32 = arith.constant 0 : i32
    %c0_i32_0 = arith.constant 0 : i32
    return %c0_i32, %arg1 : i32, i32
  }
  func.func @transform_5(%arg0: i32, %arg1: i32) -> (i32, i32) {
    %c0_i32 = arith.constant 0 : i32
    %c0_i32_0 = arith.constant 0 : i32
    return %c0_i32, %arg1 : i32, i32
  }
  func.func @transform_6(%arg0: i32, %arg1: i32) -> (i32, i32, i32) {
    %c0_i32 = arith.constant 0 : i32
    %c0_i32_0 = arith.constant 0 : i32
    return %arg0, %c0_i32, %arg1 : i32, i32, i32
  }
  func.func @transform_7(%arg0: i32, %arg1: i32) -> (i32, i32, i32, i32) {
    %c0_i32 = arith.constant 0 : i32
    %c0_i32_0 = arith.constant 0 : i32
    %c0_i32_1 = arith.constant 0 : i32
    return %arg0, %c0_i32, %c0_i32_0, %arg1 : i32, i32, i32, i32
  }
}

</mosaic_0001>

<llo_original>
// kernel: tpu_custom_call.1
$region0: #{tpu_custom_call.1}
  #allocation0 [shape = 'u32[]', space=smem, size = 0x4, offset = 0x4, fixed_abs, tag = 'smem constant byte address 0x4 - core index']
  #allocation1 [shape = 'u32[72,128]{1,0:T(1,128)}', space=vmem, size = 0x9000, scoped, tag = 'internal scratch']
  #allocation2 [shape = 'f32[1,8,320]{2,1,0:T(8,128)}', space=vmem, size = 0x3000, scoped, tag = 'scratch operand']
  #allocation3 [shape = 'f32[1,8,320]{2,1,0:T(8,128)}', space=vmem, size = 0x3000, scoped, tag = 'scratch operand']
  %s0 = inlined_call_operand.hbm [shape: f32[2,9], index: 0, kind: input, shape index: {}]
  %s1 = inlined_call_operand.hbm [shape: f32[4,8,64], index: 1, kind: input, shape index: {}]
  %s2 = inlined_call_operand.hbm [shape: f32[4,8,64], index: 2, kind: input, shape index: {}]
  %s3 = inlined_call_operand.hbm [shape: f32[4,8,64], index: 3, kind: input, shape index: {}]
  %s4 = inlined_call_operand.vmem [shape: s32[1,64], index: 4, kind: input, shape index: {}]
  %s5 = inlined_call_operand.vmem [shape: s32[1,64], index: 5, kind: input, shape index: {}]
  %s6 = inlined_call_operand.vmem [shape: f32[4,9,64], index: 6, kind: output, shape index: {0}]
  %s7 = inlined_call_operand.hbm [shape: f32[4,9,8,64], index: 7, kind: output, shape index: {1}]
  %8 = xla_tuple %s6, %s7
  %s9 = sld [smem:[#allocation0]]
  $region85: #{tpu_custom_call.1} parent=0
    _
  %s11 = ssub.s32 1, %s9
  %s12 = scalar_select 0, %s11, %s9
  $region1: #{tpu_custom_call.1} parent=0
    #allocation4 [shape = 'u8[1024]{0}', space=smem, size = 0x400, scoped, tag = 'input window, operand 0, single buffered']
    #allocation5 [shape = 's32[2]{0}', space=sflag, size = 0x8, scoped, tag = 'scoped memory for tpu_custom_call.1']
    #allocation6 [shape = 's32[2]{0}', space=sflag, size = 0x8, scoped, tag = 'scoped memory for tpu_custom_call.1']
    #allocation7 [shape = 's32[2]{0}', space=sflag, size = 0x8, scoped, tag = 'scoped memory for tpu_custom_call.1']
    #allocation8 [shape = 'u8[8192]{0}', space=vmem, size = 0x2000, scoped, tag = 'input window, operand 1']
    #allocation9 [shape = 'u8[8192]{0}', space=vmem, size = 0x2000, scoped, tag = 'input window, operand 2']
    #allocation10 [shape = 's32[2]{0}', space=sflag, size = 0x8, scoped, tag = 'scoped memory for tpu_custom_call.1']
    #allocation11 [shape = 'u8[8192]{0}', space=vmem, size = 0x2000, scoped, tag = 'input window, operand 3']
    #allocation12 [shape = 'u8[73728]{0}', space=vmem, size = 0x12000, scoped, tag = 'output window, operand 1']
    %13 = vsyncpa [#allocation7], 0
    %14 = vsyncpa [#allocation5], 0
    %s15 = scalar_lea.sflag [#allocation5], 1
    %16 = vsyncpa %s15, 0
    %17 = vsyncpa [#allocation10], 0
    %s18 = scalar_lea.sflag [#allocation10], 1
    %19 = vsyncpa %s18, 0
    %20 = vsyncpa [#allocation6], 0
    %s21 = scalar_lea.sflag [#allocation6], 1
    %22 = vsyncpa %s21, 0
    loop: start=0, step=1, limit=6
    $region2: #{tpu_custom_call.1} parent=1 // loop_pre_header
      _
    $region3: #{tpu_custom_call.1} parent=1 // loop_header
      %s24 = sphi 0, %s28
      %p25 = scmp.ge.s32.totalorder %s24, 6
      %s31 = sphi 0, %s43
      %s32 = sphi 0, %s39
      %s33 = sphi 0, %s31
      %s34 = sphi 0, %s32
      %s35 = sphi 0, %s33
      %s36 = sphi 0, %s34
      %s44 = sphi 0, %s44
      %s46 = sphi 0, %s44
      %s47 = sphi 0, %s46
      %s61 = sphi 0, %s47
      %s69 = sphi 0, %s71
      %s72 = sphi 0, %s69
      %s73 = sphi 0, %s72
      %s89 = sphi 0, %s73
      %s95 = sphi 0, %s97
      %s98 = sphi 0, %s95
      %s99 = sphi 0, %s98
      %s115 = sphi 0, %s99
      %s121 = sphi 0, %s123
      %s124 = sphi 0, %s121
      %s125 = sphi 0, %s124
      %s141 = sphi 0, %s125
      %s147 = sphi 0, %s149
      %s150 = sphi 0, %s147
      %s151 = sphi 0, %s150
      %s167 = sphi 0, %s151
      %s173 = sphi 0, %s175
      %s176 = sphi 0, %s173
      %s177 = sphi 0, %s176
      %s193 = sphi 0, %s177
      %s201 = sphi 0, %s203
      %s204 = sphi 0, %s201
      %s205 = sphi 0, %s204
      %s221 = sphi 0, %s205
      %s229 = sphi 0, %s231
      %s232 = sphi 0, %s229
      %s233 = sphi 0, %s232
      %s249 = sphi 0, %s233
    $region4: #{tpu_custom_call.1} parent=1 // loop_header_branch
      %27 = sbr.rel (%p25) target = $region8
    $region5: #{tpu_custom_call.1} parent=1 // loop_body
      %s29 = ssub.s32 %s24, 1
      %s30 = ssub.s32 %s24, 2
      %s37 = sadd.s32 1, %s32
      %p38 = scmp.ge.s32.totalorder %s37, 1
      %s39 = scalar_select %p38, 0, %s37
      %s40 = sadd.s32 1, %s31
      %s41 = scalar_select %p38, %s40, %s31
      %p42 = scmp.ge.s32.totalorder %s41, 4
      %s43 = scalar_select %p42, 0, %s41
      %s45 = sadd.s32 %s44, 1
      %p48 = scmp.eq.s32.totalorder %s24, 3
      %p49 = scmp.ne.s32.totalorder %s44, %s46
      %p50 = scmp.eq.s32.totalorder %s24, 0
      %p51 = por %p49, %p50
      %p52 = scmp.ne.s32.totalorder %s44, %s46
      %p53 = scmp.eq.s32.totalorder %s29, 3
      %p54 = por %p52, %p53
      %p55 = scmp.ne.s32.totalorder %s46, %s47
      %p56 = scmp.eq.s32.totalorder %s29, 0
      %p57 = por %p55, %p56
      %p58 = scmp.ne.s32.totalorder %s46, %s47
      %p59 = scmp.eq.s32.totalorder %s30, 3
      %p60 = por %p58, %p59
      %p62 = scmp.ne.s32.totalorder %s47, %s61
      %p63 = scmp.eq.s32.totalorder %s30, 0
      %p64 = por %p62, %p63
      %s65 = ssub.s32 %s31, %s43
      %s66 = ssub.s32 %s32, %s39
      %s67 = sor.u32 %s65, %s66
      %p68 = scmp.eq.s32.totalorder %s67, 0
      %s70 = sadd.s32 %s69, 1
      %s71 = scalar_select %p68, %s69, %s70
      %p74 = pneg %p68
      %p75 = scmp.eq.s32.totalorder %s24, 3
      %p76 = por %p74, %p75
      %p77 = scmp.ne.s32.totalorder %s69, %s72
      %p78 = scmp.eq.s32.totalorder %s24, 0
      %p79 = por %p77, %p78
      %p80 = scmp.ne.s32.totalorder %s69, %s72
      %p81 = scmp.eq.s32.totalorder %s29, 3
      %p82 = por %p80, %p81
      %p83 = scmp.ne.s32.totalorder %s72, %s73
      %p84 = scmp.eq.s32.totalorder %s29, 0
      %p85 = por %p83, %p84
      %p86 = scmp.ne.s32.totalorder %s72, %s73
      %p87 = scmp.eq.s32.totalorder %s30, 3
      %p88 = por %p86, %p87
      %p90 = scmp.ne.s32.totalorder %s73, %s89
      %p91 = scmp.eq.s32.totalorder %s30, 0
      %p92 = por %p90, %p91
      %s93 = ssub.s32 %s31, %s43
      %p94 = scmp.eq.s32.totalorder %s93, 0
      %s96 = sadd.s32 %s95, 1
      %s97 = scalar_select %p94, %s95, %s96
      %p100 = pneg %p94
      %p101 = scmp.eq.s32.totalorder %s24, 3
      %p102 = por %p100, %p101
      %p103 = scmp.ne.s32.totalorder %s95, %s98
      %p104 = scmp.eq.s32.totalorder %s24, 0
      %p105 = por %p103, %p104
      %p106 = scmp.ne.s32.totalorder %s95, %s98
      %p107 = scmp.eq.s32.totalorder %s29, 3
      %p108 = por %p106, %p107
      %p109 = scmp.ne.s32.totalorder %s98, %s99
      %p110 = scmp.eq.s32.totalorder %s29, 0
      %p111 = por %p109, %p110
      %p112 = scmp.ne.s32.totalorder %s98, %s99
      %p113 = scmp.eq.s32.totalorder %s30, 3
      %p114 = por %p112, %p113
      %p116 = scmp.ne.s32.totalorder %s99, %s115
      %p117 = scmp.eq.s32.totalorder %s30, 0
      %p118 = por %p116, %p117
      %s119 = ssub.s32 %s31, %s43
      %p120 = scmp.eq.s32.totalorder %s119, 0
      %s122 = sadd.s32 %s121, 1
      %s123 = scalar_select %p120, %s121, %s122
      %p126 = pneg %p120
      %p127 = scmp.eq.s32.totalorder %s24, 3
      %p128 = por %p126, %p127
      %p129 = scmp.ne.s32.totalorder %s121, %s124
      %p130 = scmp.eq.s32.totalorder %s24, 0
      %p131 = por %p129, %p130
      %p132 = scmp.ne.s32.totalorder %s121, %s124
      %p133 = scmp.eq.s32.totalorder %s29, 3
      %p134 = por %p132, %p133
      %p135 = scmp.ne.s32.totalorder %s124, %s125
      %p136 = scmp.eq.s32.totalorder %s29, 0
      %p137 = por %p135, %p136
      %p138 = scmp.ne.s32.totalorder %s124, %s125
      %p139 = scmp.eq.s32.totalorder %s30, 3
      %p140 = por %p138, %p139
      %p142 = scmp.ne.s32.totalorder %s125, %s141
      %p143 = scmp.eq.s32.totalorder %s30, 0
      %p144 = por %p142, %p143
      %s145 = ssub.s32 %s32, %s39
      %p146 = scmp.eq.s32.totalorder %s145, 0
      %s148 = sadd.s32 %s147, 1
      %s149 = scalar_select %p146, %s147, %s148
      %p152 = pneg %p146
      %p153 = scmp.eq.s32.totalorder %s24, 3
      %p154 = por %p152, %p153
      %p155 = scmp.ne.s32.totalorder %s147, %s150
      %p156 = scmp.eq.s32.totalorder %s24, 0
      %p157 = por %p155, %p156
      %p158 = scmp.ne.s32.totalorder %s147, %s150
      %p159 = scmp.eq.s32.totalorder %s29, 3
      %p160 = por %p158, %p159
      %p161 = scmp.ne.s32.totalorder %s150, %s151
      %p162 = scmp.eq.s32.totalorder %s29, 0
      %p163 = por %p161, %p162
      %p164 = scmp.ne.s32.totalorder %s150, %s151
      %p165 = scmp.eq.s32.totalorder %s30, 3
      %p166 = por %p164, %p165
      %p168 = scmp.ne.s32.totalorder %s151, %s167
      %p169 = scmp.eq.s32.totalorder %s30, 0
      %p170 = por %p168, %p169
      %s171 = ssub.s32 %s32, %s39
      %p172 = scmp.eq.s32.totalorder %s171, 0
      %s174 = sadd.s32 %s173, 1
      %s175 = scalar_select %p172, %s173, %s174
      %p178 = pneg %p172
      %p179 = scmp.eq.s32.totalorder %s24, 3
      %p180 = por %p178, %p179
      %p181 = scmp.ne.s32.totalorder %s173, %s176
      %p182 = scmp.eq.s32.totalorder %s24, 0
      %p183 = por %p181, %p182
      %p184 = scmp.ne.s32.totalorder %s173, %s176
      %p185 = scmp.eq.s32.totalorder %s29, 3
      %p186 = por %p184, %p185
      %p187 = scmp.ne.s32.totalorder %s176, %s177
      %p188 = scmp.eq.s32.totalorder %s29, 0
      %p189 = por %p187, %p188
      %p190 = scmp.ne.s32.totalorder %s176, %s177
      %p191 = scmp.eq.s32.totalorder %s30, 3
      %p192 = por %p190, %p191
      %p194 = scmp.ne.s32.totalorder %s177, %s193
      %p195 = scmp.eq.s32.totalorder %s30, 0
      %p196 = por %p194, %p195
      %s197 = ssub.s32 %s31, %s43
      %s198 = ssub.s32 %s32, %s39
      %s199 = sor.u32 %s197, %s198
      %p200 = scmp.eq.s32.totalorder %s199, 0
      %s202 = sadd.s32 %s201, 1
      %s203 = scalar_select %p200, %s201, %s202
      %p206 = pneg %p200
      %p207 = scmp.eq.s32.totalorder %s24, 3
      %p208 = por %p206, %p207
      %p209 = scmp.ne.s32.totalorder %s201, %s204
      %p210 = scmp.eq.s32.totalorder %s24, 0
      %p211 = por %p209, %p210
      %p212 = scmp.ne.s32.totalorder %s201, %s204
      %p213 = scmp.eq.s32.totalorder %s29, 3
      %p214 = por %p212, %p213
      %p215 = scmp.ne.s32.totalorder %s204, %s205
      %p216 = scmp.eq.s32.totalorder %s29, 0
      %p217 = por %p215, %p216
      %p218 = scmp.ne.s32.totalorder %s204, %s205
      %p219 = scmp.eq.s32.totalorder %s30, 3
      %p220 = por %p218, %p219
      %p222 = scmp.ne.s32.totalorder %s205, %s221
      %p223 = scmp.eq.s32.totalorder %s30, 0
      %p224 = por %p222, %p223
      %s225 = ssub.s32 %s31, %s43
      %s226 = ssub.s32 %s32, %s39
      %s227 = sor.u32 %s225, %s226
      %p228 = scmp.eq.s32.totalorder %s227, 0
      %s230 = sadd.s32 %s229, 1
      %s231 = scalar_select %p228, %s229, %s230
      %p234 = pneg %p228
      %p235 = scmp.eq.s32.totalorder %s24, 3
      %p236 = por %p234, %p235
      %p237 = scmp.ne.s32.totalorder %s229, %s232
      %p238 = scmp.eq.s32.totalorder %s24, 0
      %p239 = por %p237, %p238
      %p240 = scmp.ne.s32.totalorder %s229, %s232
      %p241 = scmp.eq.s32.totalorder %s29, 3
      %p242 = por %p240, %p241
      %p243 = scmp.ne.s32.totalorder %s232, %s233
      %p244 = scmp.eq.s32.totalorder %s29, 0
      %p245 = por %p243, %p244
      %p246 = scmp.ne.s32.totalorder %s232, %s233
      %p247 = scmp.eq.s32.totalorder %s30, 3
      %p248 = por %p246, %p247
      %p250 = scmp.ne.s32.totalorder %s233, %s249
      %p251 = scmp.eq.s32.totalorder %s30, 0
      %p252 = por %p250, %p251
      %p253 = scmp.le.s32.totalorder 1, %s24
      %p254 = scmp.lt.s32.totalorder %s24, 5
      %p255 = pnand %p253, %p254
      %p256 = pneg %p255
      // Predicated region
      $region9: #{tpu_custom_call.1} parent=5 // pred_check
        _
      $region10: #{tpu_custom_call.1} parent=5 // pred_check_branch
        %258 = sbr.rel (%p255) target = $region12
      $region11: #{tpu_custom_call.1} parent=5 // pred_region
        %s259 = ssub.s32 %s24, 1
        // Predicated region
        $region13: #{tpu_custom_call.1} parent=11 // pred_check
          %p260 = pneg %p57
        $region14: #{tpu_custom_call.1} parent=11 // pred_check_branch
          %262 = sbr.rel (%p260) target = $region16
        $region15: #{tpu_custom_call.1} parent=11 // pred_region
          %264 = vsyncadd [#allocation7], 0
          %s266 = sshll.u32 %s0, 4
          %s267 = int_to_ptr.hbm [resolvable:$true] %s266
          %269 = dma.hbm_to_smem %s267, 32, [#allocation4], [#allocation7]
        $region16: #{tpu_custom_call.1} parent=11 // pred_fallthru
          _
        // Predicated region
        $region17: #{tpu_custom_call.1} parent=11 // pred_check
          %p270 = pneg %p163
        $region18: #{tpu_custom_call.1} parent=11 // pred_check_branch
          %272 = sbr.rel (%p270) target = $region20
        $region19: #{tpu_custom_call.1} parent=11 // pred_region
          %p273 = scmp.lt.s32.totalorder %s34, 0
          %s274 = scalar_select %p273, %s34, 0
          %s275 = scalar_lea.vmem %s4, %s274
        $region20: #{tpu_custom_call.1} parent=11 // pred_fallthru
          _
        // Predicated region
        $region21: #{tpu_custom_call.1} parent=11 // pred_check
          %p276 = pneg %p189
        $region22: #{tpu_custom_call.1} parent=11 // pred_check_branch
          %278 = sbr.rel (%p276) target = $region24
        $region23: #{tpu_custom_call.1} parent=11 // pred_region
          %p279 = scmp.lt.s32.totalorder %s34, 0
          %s280 = scalar_select %p279, %s34, 0
          %s281 = scalar_lea.vmem %s5, %s280
        $region24: #{tpu_custom_call.1} parent=11 // pred_fallthru
          _
      $region12: #{tpu_custom_call.1} parent=5 // pred_fallthru
        _
      %p282 = scmp.lt.s32.totalorder %s24, 4
      // Predicated region
      $region25: #{tpu_custom_call.1} parent=5 // pred_check
        %p283 = pneg %p282
      $region26: #{tpu_custom_call.1} parent=5 // pred_check_branch
        %285 = sbr.rel (%p283) target = $region28
      $region27: #{tpu_custom_call.1} parent=5 // pred_region
        // Predicated region
        $region29: #{tpu_custom_call.1} parent=27 // pred_check
          %p286 = pneg %p79
        $region30: #{tpu_custom_call.1} parent=27 // pred_check_branch
          %288 = sbr.rel (%p286) target = $region32
        $region31: #{tpu_custom_call.1} parent=27 // pred_region
          %s289 = sand.u32 %s69, 1
          %s290 = scalar_lea.sflag [#allocation5], %s289
          %s291 = sand.u32 %s69, 1
          %s292 = smul.addr %s291, 8
          %s293 = scalar_lea.vmem [#allocation8], %s292
          %295 = vsyncadd %s290, 0
          %s296 = sadd.s32 %s32, %s31
          %s297 = smul.addr %s296, 8
          %s298 = scalar_lea.hbm %s1, %s297
          %s300 = sshll.u32 %s298, 4
          %s301 = int_to_ptr.hbm [resolvable:$true] %s300
          %s302 = sshll.u32 %s293, 4
          %s303 = int_to_ptr.vmem [resolvable:$true] %s302
          %305 = dma.hbm_to_vmem [thread:$0]  %s301, 128, %s303, %s290
        $region32: #{tpu_custom_call.1} parent=27 // pred_fallthru
          _
        // Predicated region
        $region33: #{tpu_custom_call.1} parent=27 // pred_check
          %p306 = pneg %p105
        $region34: #{tpu_custom_call.1} parent=27 // pred_check_branch
          %308 = sbr.rel (%p306) target = $region36
        $region35: #{tpu_custom_call.1} parent=27 // pred_region
          %s309 = sand.u32 %s24, 1
          %s310 = scalar_lea.sflag [#allocation10], %s309
          %s311 = sand.u32 %s95, 1
          %s312 = smul.addr %s311, 8
          %s313 = scalar_lea.vmem [#allocation9], %s312
          %315 = vsyncadd %s310, 0
          %s316 = smul.addr %s31, 8
          %s317 = scalar_lea.hbm %s2, %s316
          %s319 = sshll.u32 %s317, 4
          %s320 = int_to_ptr.hbm [resolvable:$true] %s319
          %s321 = sshll.u32 %s313, 4
          %s322 = int_to_ptr.vmem [resolvable:$true] %s321
          %324 = dma.hbm_to_vmem [thread:$0]  %s320, 128, %s322, %s310
        $region36: #{tpu_custom_call.1} parent=27 // pred_fallthru
          _
        // Predicated region
        $region37: #{tpu_custom_call.1} parent=27 // pred_check
          %p325 = pneg %p131
        $region38: #{tpu_custom_call.1} parent=27 // pred_check_branch
          %327 = sbr.rel (%p325) target = $region40
        $region39: #{tpu_custom_call.1} parent=27 // pred_region
          %s328 = sand.u32 %s24, 1
          %s329 = scalar_lea.sflag [#allocation10], %s328
          %s330 = sand.u32 %s121, 1
          %s331 = smul.addr %s330, 8
          %s332 = scalar_lea.vmem [#allocation11], %s331
          %334 = vsyncadd %s329, 0
          %s335 = smul.addr %s31, 8
          %s336 = scalar_lea.hbm %s3, %s335
          %s338 = sshll.u32 %s336, 4
          %s339 = int_to_ptr.hbm [resolvable:$true] %s338
          %s340 = sshll.u32 %s332, 4
          %s341 = int_to_ptr.vmem [resolvable:$true] %s340
          %343 = dma.hbm_to_vmem [thread:$0]  %s339, 128, %s341, %s329
        $region40: #{tpu_custom_call.1} parent=27 // pred_fallthru
          _
      $region28: #{tpu_custom_call.1} parent=5 // pred_fallthru
        _
      %p344 = scmp.le.s32.totalorder 1, %s24
      %p345 = scmp.lt.s32.totalorder %s24, 5
      %p346 = pnand %p344, %p345
      %p347 = pneg %p346
      // Predicated region
      $region41: #{tpu_custom_call.1} parent=5 // pred_check
        _
      $region42: #{tpu_custom_call.1} parent=5 // pred_check_branch
        %349 = sbr.rel (%p346) target = $region44
      $region43: #{tpu_custom_call.1} parent=5 // pred_region
        %s350 = ssub.s32 %s24, 1
        // Predicated region
        $region45: #{tpu_custom_call.1} parent=43 // pred_check
          %p351 = pneg %p57
        $region46: #{tpu_custom_call.1} parent=43 // pred_check_branch
          %353 = sbr.rel (%p351) target = $region48
        $region47: #{tpu_custom_call.1} parent=43 // pred_region
          %355 = dma.done [#allocation7], 32
        $region48: #{tpu_custom_call.1} parent=43 // pred_fallthru
          _
        %s356 = sand.u32 %s72, 1
        %s357 = scalar_lea.sflag [#allocation5], %s356
        %s358 = sand.u32 %s72, 1
        %s359 = smul.addr %s358, 8
        %s360 = scalar_lea.vmem [#allocation8], %s359
        // Predicated region
        $region49: #{tpu_custom_call.1} parent=43 // pred_check
          %p361 = pneg %p85
        $region50: #{tpu_custom_call.1} parent=43 // pred_check_branch
          %363 = sbr.rel (%p361) target = $region52
        $region51: #{tpu_custom_call.1} parent=43 // pred_region
          %365 = dma.done %s357, 128
        $region52: #{tpu_custom_call.1} parent=43 // pred_fallthru
          _
        %s366 = sand.u32 %s29, 1
        %s367 = scalar_lea.sflag [#allocation10], %s366
        %s368 = sand.u32 %s98, 1
        %s369 = smul.addr %s368, 8
        %s370 = scalar_lea.vmem [#allocation9], %s369
        // Predicated region
        $region53: #{tpu_custom_call.1} parent=43 // pred_check
          %p371 = pneg %p111
        $region54: #{tpu_custom_call.1} parent=43 // pred_check_branch
          %373 = sbr.rel (%p371) target = $region56
        $region55: #{tpu_custom_call.1} parent=43 // pred_region
          %375 = dma.done %s367, 128
        $region56: #{tpu_custom_call.1} parent=43 // pred_fallthru
          _
        %s376 = sand.u32 %s29, 1
        %s377 = scalar_lea.sflag [#allocation10], %s376
        %s378 = sand.u32 %s124, 1
        %s379 = smul.addr %s378, 8
        %s380 = scalar_lea.vmem [#allocation11], %s379
        // Predicated region
        $region57: #{tpu_custom_call.1} parent=43 // pred_check
          %p381 = pneg %p137
        $region58: #{tpu_custom_call.1} parent=43 // pred_check_branch
          %383 = sbr.rel (%p381) target = $region60
        $region59: #{tpu_custom_call.1} parent=43 // pred_region
          %385 = dma.done %s377, 128
        $region60: #{tpu_custom_call.1} parent=43 // pred_fallthru
          _
        %386 = sfence
        %p387 = pneg %p57
        %p388 = pneg %p54
        %s389 = sand.u32 %s72, 1
        %s390 = scalar_lea.sflag [#allocation5], %s389
        %s391 = sand.u32 %s72, 1
        %s392 = smul.addr %s391, 8
        %s393 = scalar_lea.vmem [#allocation8], %s392
        %p394 = pneg %p85
        %p395 = pneg %p82
        %s396 = sand.u32 %s29, 1
        %s397 = scalar_lea.sflag [#allocation10], %s396
        %s398 = sand.u32 %s98, 1
        %s399 = smul.addr %s398, 8
        %s400 = scalar_lea.vmem [#allocation9], %s399
        %p401 = pneg %p111
        %p402 = pneg %p108
        %s403 = sand.u32 %s29, 1
        %s404 = scalar_lea.sflag [#allocation10], %s403
        %s405 = sand.u32 %s124, 1
        %s406 = smul.addr %s405, 8
        %s407 = scalar_lea.vmem [#allocation11], %s406
        %p408 = pneg %p137
        %p409 = pneg %p134
        %p410 = scmp.lt.s32.totalorder %s34, 0
        %s411 = scalar_select %p410, %s34, 0
        %s412 = scalar_lea.vmem %s4, %s411
        %p413 = pneg %p163
        %p414 = pneg %p160
        %p415 = scmp.lt.s32.totalorder %s34, 0
        %s416 = scalar_select %p415, %s34, 0
        %s417 = scalar_lea.vmem %s5, %s416
        %p418 = pneg %p189
        %p419 = pneg %p186
        %p420 = pneg %p217
        %p421 = pneg %p214
        %p422 = scmp.lt.s32.totalorder %s33, 3
        %s423 = scalar_select %p422, %s33, 3
        %p424 = scmp.lt.s32.totalorder %s34, 0
        %s425 = scalar_select %p424, %s34, 0
        %s426 = smul.addr %s423, 2
        %s427 = sadd.s32 %s425, %s426
        %s428 = smul.addr %s427, 8
        %s429 = scalar_lea.vmem %s6, %s428
        %p430 = pneg %p245
        %p431 = pneg %p242
        %s432 = sand.u32 %s232, 1
        %s433 = scalar_lea.sflag [#allocation6], %s432
        %s434 = sand.u32 %s232, 1
        %s435 = smul.addr %s434, 72
        %s436 = scalar_lea.vmem [#allocation12], %s435
        %p437 = scmp.lt.s32.totalorder %s34, 0
        %s438 = scalar_select %p437, %s34, 0
        %s439 = scalar_lea.vmem %s4, %s438
        %p440 = scmp.lt.s32.totalorder %s34, 0
        %s441 = scalar_select %p440, %s34, 0
        %s442 = scalar_lea.vmem %s5, %s441
        %p443 = scmp.lt.s32.totalorder %s33, 3
        %s444 = scalar_select %p443, %s33, 3
        %p445 = scmp.lt.s32.totalorder %s34, 0
        %s446 = scalar_select %p445, %s34, 0
        %s447 = smul.addr %s444, 2
        %s448 = sadd.s32 %s446, %s447
        %s449 = smul.addr %s448, 8
        %s450 = scalar_lea.vmem %s6, %s449
        %p451 = scmp.lt.s32.totalorder %s33, 0
        %s452 = ssub.s32 0, %s33
        %s453 = scalar_select %p451, %s452, %s33
        %s454 = sand.u32 %s453, 1
        %s455 = ssub.s32 0, %s454
        %s456 = scalar_select %p451, %s455, %s454
        %p457 = scmp.ne.s32.totalorder %s456, 0
        %p458 = scmp.lt.s32.totalorder %s456, 0
        %p459 = pnand %p458, %p457
        %p460 = pneg %p459
        %s461 = sadd.s32 %s456, 2
        %s462 = scalar_select %p460, %s461, %s456
        %p463 = scmp.eq.s32.totalorder %s34, 0
        // Predicated region
        $region61: #{tpu_custom_call.1} parent=43 // pred_check
          %p464 = pneg %p463
        $region62: #{tpu_custom_call.1} parent=43 // pred_check_branch
          %466 = sbr.rel (%p464) target = $region64
        $region63: #{tpu_custom_call.1} parent=43 // pred_region
          %467 = vst [vmem:[#allocation2] sm:$0xff] 0.0
          %468 = vst [vmem:[#allocation3] sm:$0xff] 0.0
          %vm469 = vcmask 1048064
          %470 = vst.msk [vmem:[#allocation2 + $0x8] sm:$0xff] %vm469, 0.0
          %vm471 = vcmask 523264
          %472 = vst.msk [vmem:[#allocation2 + $0x10] sm:$0xff] %vm471, 0.0
          %473 = vst.msk [vmem:[#allocation3 + $0x8] sm:$0xff] %vm469, 0.0
          %474 = vst.msk [vmem:[#allocation3 + $0x10] sm:$0xff] %vm471, 0.0
          %v475 = vld [vmem:[%s370] sm:$0xff]
          %v476 = vmul.f32 %v475, %v475
          %v477 = vsel %vm471, %v476, 0.0
          %v478 = vrot.slane %v477, 4
          %v479 = vadd.f32 %v477, %v478
          %v480 = vrot.slane %v479, 2
          %v481 = vadd.f32 %v479, %v480
          %v482 = vrot.slane %v481, 1
          %v483 = vadd.f32 %v481, %v482
          %v484 = vmax.f32 %v483, 1e-24
          %v485 = vrsqrt.pop %v484
          %v486 = vmul.f32 %v485, %v484
          %v487 = vmul.f32 %v486, %v485
          %v488 = vmul.f32 0.5, %v487
          %v489 = vsub.f32 1.5, %v488
          %v490 = vmul.f32 %v485, %v489
          %vm491 = vweird.f32 %v484
          %vm492 = vweird.f32 %v485
          %vm493 = vmor %vm491, %vm492
          %v494 = vsel %vm493, %v485, %v490
          %v495 = vmul.f32 %v475, %v494
          %496 = vst.msk [vmem:[#allocation2 + $0x8] sm:$0xff] %vm471, %v495
          %v497 = vld [vmem:[%s380] sm:$0xff]
          %498 = vst.msk [vmem:[#allocation3 + $0x8] sm:$0xff] %vm471, %v497
        $region64: #{tpu_custom_call.1} parent=43 // pred_fallthru
          _
        %v499 = vld [vmem:[%s360] sm:$0xff]
        %v500 = vld [vmem:[%s439] sm:$0x1]
        %v501 = vld [vmem:[%s442] sm:$0x1]
        %s502 = smul.u32 %s34, 3
        %s503 = smul.addr %s502, 8
        %s504 = scalar_lea.vmem [#allocation2], %s503
        %v505 = vld [vmem:[%s504] sm:$0xff]
        %v506 = vld [vmem:[%s504 + $0x8] sm:$0xff]
        %s507 = smul.addr %s502, 8
        %s508 = scalar_lea.vmem [#allocation3], %s507
        %v509 = vld [vmem:[%s508] sm:$0xff]
        %v510 = vld [vmem:[%s508 + $0x8] sm:$0xff]
        %513 = vrot.lane.b32.xlu0 %v505, 9
        %v514 = vpop.permute.xlu0 %513
        %515 = vrot.lane.b32.xlu0 %v506, 9
        %v516 = vpop.permute.xlu0 %515
        %vm517 = vcmask 72704
        %v518 = vsel %vm517, %v514, %v516
        %v520 = vmul.f32 %v499, %v518
        %vm521 = vcmask 523264
        %v522 = vsel %vm521, %v520, 0.0
        %v523 = vrot.slane %v522, 4
        %v524 = vadd.f32 %v522, %v523
        %v525 = vrot.slane %v524, 2
        %v526 = vadd.f32 %v524, %v525
        %v527 = vrot.slane %v526, 1
        %v528 = vadd.f32 %v526, %v527
        %s529 = smul.u32 %s462, 128
        %s530 = sld [smem:[#allocation4 + %s529]]
        %v531 = vstv %s530
        %v532 = vadd.f32 %v528, %v531
        %vm533 = vcmp.lt.s32.totalorder %v501, 1
        %vm534 = vcmp.ge.s32.totalorder %v501, 9
        %vm535 = vmor %vm533, %vm534
        %vm536 = vcmp.lt.s32.totalorder %v500, 1
        %vm537 = vmor %vm535, %vm536
        %vm538 = vcmp.ge.s32.totalorder %v500, 9
        %vm539 = vmor %vm537, %vm538
        %v540 = vsel %vm539, -inf, %v532
        %vm541 = vcmask 516096
        %542 = vst.msk [vmem:[%s450] sm:$0x1] %vm541, %v540
        %v543 = vsel %vm535, 1, 0
        %v544 = vperm.slane %v543, 0
        %vm545 = vcmp.eq.s32.totalorder %v544, 1
        %548 = vrot.lane.b32.xlu0 %v509, 9
        %v549 = vpop.permute.xlu0 %548
        %550 = vrot.lane.b32.xlu0 %v510, 9
        %v551 = vpop.permute.xlu0 %550
        %v552 = vsel %vm517, %v549, %v551
        %v554 = vsel %vm545, 0.0, %v552
        %555 = vst.msk [vmem:[%s436] sm:$0xff] %vm521, %v554
        %v556 = vld [vmem:[%s504] sm:$0xff]
        %v557 = vld [vmem:[%s504 + $0x8] sm:$0xff]
        %v558 = vld [vmem:[%s508] sm:$0xff]
        %v559 = vld [vmem:[%s508 + $0x8] sm:$0xff]
        %562 = vrot.lane.b32.xlu0 %v556, 8
        %v563 = vpop.permute.xlu0 %562
        %564 = vrot.lane.b32.xlu0 %v557, 8
        %v565 = vpop.permute.xlu0 %564
        %vm566 = vcmask 64512
        %v567 = vsel %vm566, %v563, %v565
        %v569 = vmul.f32 %v499, %v567
        %v570 = vsel %vm521, %v569, 0.0
        %v571 = vrot.slane %v570, 4
        %v572 = vadd.f32 %v570, %v571
        %v573 = vrot.slane %v572, 2
        %v574 = vadd.f32 %v572, %v573
        %v575 = vrot.slane %v574, 1
        %v576 = vadd.f32 %v574, %v575
        %s577 = sadd.s32 %s529, 1
        %s578 = sld [smem:[#allocation4 + %s577]]
        %v579 = vstv %s578
        %v580 = vadd.f32 %v576, %v579
        %vm581 = vcmp.lt.s32.totalorder %v501, 0
        %vm582 = vcmp.ge.s32.totalorder %v501, 8
        %vm583 = vmor %vm581, %vm582
        %vm584 = vmor %vm583, %vm536
        %vm585 = vmor %vm584, %vm538
        %v586 = vsel %vm585, -inf, %v580
        %587 = vst.msk [vmem:[%s450 + $0x1] sm:$0x1] %vm541, %v586
        %v588 = vsel %vm583, 1, 0
        %v589 = vperm.slane %v588, 0
        %vm590 = vcmp.eq.s32.totalorder %v589, 1
        %593 = vrot.lane.b32.xlu0 %v558, 8
        %v594 = vpop.permute.xlu0 %593
        %595 = vrot.lane.b32.xlu0 %v559, 8
        %v596 = vpop.permute.xlu0 %595
        %v597 = vsel %vm566, %v594, %v596
        %v599 = vsel %vm590, 0.0, %v597
        %s600 = scalar_lea.vmem %s436, 8 [#allocation12]
        %601 = vst.msk [vmem:[%s600] sm:$0xff] %vm521, %v599
        %v602 = vld [vmem:[%s504] sm:$0xff]
        %v603 = vld [vmem:[%s504 + $0x8] sm:$0xff]
        %v604 = vld [vmem:[%s508] sm:$0xff]
        %v605 = vld [vmem:[%s508 + $0x8] sm:$0xff]
        %608 = vrot.lane.b32.xlu0 %v602, 7
        %v609 = vpop.permute.xlu0 %608
        %610 = vrot.lane.b32.xlu0 %v603, 7
        %v611 = vpop.permute.xlu0 %610
        %vm612 = vcmask 56320
        %v613 = vsel %vm612, %v609, %v611
        %v615 = vmul.f32 %v499, %v613
        %v616 = vsel %vm521, %v615, 0.0
        %v617 = vrot.slane %v616, 4
        %v618 = vadd.f32 %v616, %v617
        %v619 = vrot.slane %v618, 2
        %v620 = vadd.f32 %v618, %v619
        %v621 = vrot.slane %v620, 1
        %v622 = vadd.f32 %v620, %v621
        %s623 = sadd.s32 %s529, 2
        %s624 = sld [smem:[#allocation4 + %s623]]
        %v625 = vstv %s624
        %v626 = vadd.f32 %v622, %v625
        %vm627 = vcmp.lt.s32.totalorder %v501, 4294967295
        %vm628 = vcmp.ge.s32.totalorder %v501, 7
        %vm629 = vmor %vm627, %vm628
        %vm630 = vmor %vm629, %vm536
        %vm631 = vmor %vm630, %vm538
        %v632 = vsel %vm631, -inf, %v626
        %633 = vst.msk [vmem:[%s450 + $0x2] sm:$0x1] %vm541, %v632
        %v634 = vsel %vm629, 1, 0
        %v635 = vperm.slane %v634, 0
        %vm636 = vcmp.eq.s32.totalorder %v635, 1
        %639 = vrot.lane.b32.xlu0 %v604, 7
        %v640 = vpop.permute.xlu0 %639
        %641 = vrot.lane.b32.xlu0 %v605, 7
        %v642 = vpop.permute.xlu0 %641
        %v643 = vsel %vm612, %v640, %v642
        %v645 = vsel %vm636, 0.0, %v643
        %s646 = scalar_lea.vmem %s436, 16 [#allocation12]
        %647 = vst.msk [vmem:[%s646] sm:$0xff] %vm521, %v645
        %v648 = vld [vmem:[%s504] sm:$0xff]
        %v649 = vld [vmem:[%s504 + $0x8] sm:$0xff]
        %v650 = vld [vmem:[%s508] sm:$0xff]
        %v651 = vld [vmem:[%s508 + $0x8] sm:$0xff]
        %654 = vrot.lane.b32.xlu0 %v648, 1
        %v655 = vpop.permute.xlu0 %654
        %656 = vrot.lane.b32.xlu0 %v649, 1
        %v657 = vpop.permute.xlu0 %656
        %vm658 = vcmask 7168
        %v659 = vsel %vm658, %v655, %v657
        %v661 = vmul.f32 %v499, %v659
        %v662 = vsel %vm521, %v661, 0.0
        %v663 = vrot.slane %v662, 4
        %v664 = vadd.f32 %v662, %v663
        %v665 = vrot.slane %v664, 2
        %v666 = vadd.f32 %v664, %v665
        %v667 = vrot.slane %v666, 1
        %v668 = vadd.f32 %v666, %v667
        %s669 = sadd.s32 %s529, 3
        %s670 = sld [smem:[#allocation4 + %s669]]
        %v671 = vstv %s670
        %v672 = vadd.f32 %v668, %v671
        %vm673 = vcmp.lt.s32.totalorder %v500, 0
        %vm674 = vmor %vm535, %vm673
        %vm675 = vcmp.ge.s32.totalorder %v500, 8
        %vm676 = vmor %vm674, %vm675
        %v677 = vsel %vm676, -inf, %v672
        %678 = vst.msk [vmem:[%s450 + $0x3] sm:$0x1] %vm541, %v677
        %681 = vrot.lane.b32.xlu0 %v650, 1
        %v682 = vpop.permute.xlu0 %681
        %683 = vrot.lane.b32.xlu0 %v651, 1
        %v684 = vpop.permute.xlu0 %683
        %v685 = vsel %vm658, %v682, %v684
        %v687 = vsel %vm545, 0.0, %v685
        %s688 = scalar_lea.vmem %s436, 24 [#allocation12]
        %689 = vst.msk [vmem:[%s688] sm:$0xff] %vm521, %v687
        %v690 = vld [vmem:[%s504 + $0x8] sm:$0xff]
        %v691 = vld [vmem:[%s508 + $0x8] sm:$0xff]
        %v692 = vmul.f32 %v499, %v690
        %v693 = vsel %vm521, %v692, 0.0
        %v694 = vrot.slane %v693, 4
        %v695 = vadd.f32 %v693, %v694
        %v696 = vrot.slane %v695, 2
        %v697 = vadd.f32 %v695, %v696
        %v698 = vrot.slane %v697, 1
        %v699 = vadd.f32 %v697, %v698
        %s700 = sadd.s32 %s529, 4
        %s701 = sld [smem:[#allocation4 + %s700]]
        %v702 = vstv %s701
        %v703 = vadd.f32 %v699, %v702
        %vm704 = vmor %vm583, %vm673
        %vm705 = vmor %vm704, %vm675
        %v706 = vsel %vm705, -inf, %v703
        %707 = vst.msk [vmem:[%s450 + $0x4] sm:$0x1] %vm541, %v706
        %v708 = vsel %vm590, 0.0, %v691
        %s709 = scalar_lea.vmem %s436, 32 [#allocation12]
        %710 = vst.msk [vmem:[%s709] sm:$0xff] %vm521, %v708
        %v711 = vld [vmem:[%s504 + $0x8] sm:$0xff]
        %v712 = vld [vmem:[%s508 + $0x8] sm:$0xff]
        %714 = vrot.lane.b32.xlu0 %v711, 127
        %v715 = vpop.permute.xlu0 %714
        %v717 = vmul.f32 %v499, %v715
        %v718 = vsel %vm521, %v717, 0.0
        %v719 = vrot.slane %v718, 4
        %v720 = vadd.f32 %v718, %v719
        %v721 = vrot.slane %v720, 2
        %v722 = vadd.f32 %v720, %v721
        %v723 = vrot.slane %v722, 1
        %v724 = vadd.f32 %v722, %v723
        %s725 = sadd.s32 %s529, 5
        %s726 = sld [smem:[#allocation4 + %s725]]
        %v727 = vstv %s726
        %v728 = vadd.f32 %v724, %v727
        %vm729 = vmor %vm629, %vm673
        %vm730 = vmor %vm729, %vm675
        %v731 = vsel %vm730, -inf, %v728
        %732 = vst.msk [vmem:[%s450 + $0x5] sm:$0x1] %vm541, %v731
        %734 = vrot.lane.b32.xlu0 %v712, 127
        %v735 = vpop.permute.xlu0 %734
        %v737 = vsel %vm636, 0.0, %v735
        %s738 = scalar_lea.vmem %s436, 40 [#allocation12]
        %739 = vst.msk [vmem:[%s738] sm:$0xff] %vm521, %v737
        %v740 = vld [vmem:[%s504 + $0x8] sm:$0xff]
        %v741 = vld [vmem:[%s508 + $0x8] sm:$0xff]
        %743 = vrot.lane.b32.xlu0 %v740, 121
        %v744 = vpop.permute.xlu0 %743
        %v746 = vmul.f32 %v499, %v744
        %v747 = vsel %vm521, %v746, 0.0
        %v748 = vrot.slane %v747, 4
        %v749 = vadd.f32 %v747, %v748
        %v750 = vrot.slane %v749, 2
        %v751 = vadd.f32 %v749, %v750
        %v752 = vrot.slane %v751, 1
        %v753 = vadd.f32 %v751, %v752
        %s754 = sadd.s32 %s529, 6
        %s755 = sld [smem:[#allocation4 + %s754]]
        %v756 = vstv %s755
        %v757 = vadd.f32 %v753, %v756
        %vm758 = vcmp.lt.s32.totalorder %v500, 4294967295
        %vm759 = vmor %vm535, %vm758
        %vm760 = vcmp.ge.s32.totalorder %v500, 7
        %vm761 = vmor %vm759, %vm760
        %v762 = vsel %vm761, -inf, %v757
        %763 = vst.msk [vmem:[%s450 + $0x6] sm:$0x1] %vm541, %v762
        %765 = vrot.lane.b32.xlu0 %v741, 121
        %v766 = vpop.permute.xlu0 %765
        %v768 = vsel %vm545, 0.0, %v766
        %s769 = scalar_lea.vmem %s436, 48 [#allocation12]
        %770 = vst.msk [vmem:[%s769] sm:$0xff] %vm521, %v768
        %v771 = vld [vmem:[%s504 + $0x8] sm:$0xff]
        %v772 = vld [vmem:[%s508 + $0x8] sm:$0xff]
        %774 = vrot.lane.b32.xlu0 %v771, 120
        %v775 = vpop.permute.xlu0 %774
        %v777 = vmul.f32 %v499, %v775
        %v778 = vsel %vm521, %v777, 0.0
        %v779 = vrot.slane %v778, 4
        %v780 = vadd.f32 %v778, %v779
        %v781 = vrot.slane %v780, 2
        %v782 = vadd.f32 %v780, %v781
        %v783 = vrot.slane %v782, 1
        %v784 = vadd.f32 %v782, %v783
        %s785 = sadd.s32 %s529, 7
        %s786 = sld [smem:[#allocation4 + %s785]]
        %v787 = vstv %s786
        %v788 = vadd.f32 %v784, %v787
        %vm789 = vmor %vm583, %vm758
        %vm790 = vmor %vm789, %vm760
        %v791 = vsel %vm790, -inf, %v788
        %792 = vst.msk [vmem:[%s450 + $0x7] sm:$0x1] %vm541, %v791
        %794 = vrot.lane.b32.xlu0 %v772, 120
        %v795 = vpop.permute.xlu0 %794
        %v797 = vsel %vm590, 0.0, %v795
        %s798 = scalar_lea.vmem %s436, 56 [#allocation12]
        %799 = vst.msk [vmem:[%s798] sm:$0xff] %vm521, %v797
        %v800 = vld [vmem:[%s504 + $0x8] sm:$0xff]
        %v801 = vld [vmem:[%s508 + $0x8] sm:$0xff]
        %803 = vrot.lane.b32.xlu0 %v800, 119
        %v804 = vpop.permute.xlu0 %803
        %v806 = vmul.f32 %v499, %v804
        %v807 = vsel %vm521, %v806, 0.0
        %v808 = vrot.slane %v807, 4
        %v809 = vadd.f32 %v807, %v808
        %v810 = vrot.slane %v809, 2
        %v811 = vadd.f32 %v809, %v810
        %v812 = vrot.slane %v811, 1
        %v813 = vadd.f32 %v811, %v812
        %s814 = sadd.s32 %s529, 8
        %s815 = sld [smem:[#allocation4 + %s814]]
        %v816 = vstv %s815
        %v817 = vadd.f32 %v813, %v816
        %vm818 = vmor %vm629, %vm758
        %vm819 = vmor %vm818, %vm760
        %v820 = vsel %vm819, -inf, %v817
        %821 = vst.msk [vmem:[%s450 + $0x8] sm:$0x1] %vm541, %v820
        %823 = vrot.lane.b32.xlu0 %v801, 119
        %v824 = vpop.permute.xlu0 %823
        %v826 = vsel %vm636, 0.0, %v824
        %s827 = scalar_lea.vmem %s436, 64 [#allocation12]
        %828 = vst.msk [vmem:[%s827] sm:$0xff] %vm521, %v826
        %p829 = scmp.lt.s32.totalorder %s33, 3
        %s830 = scalar_select %p829, %s33, 3
        %p831 = scmp.lt.s32.totalorder %s34, 0
        %s832 = scalar_select %p831, %s34, 0
        %s833 = smul.addr %s830, 2
        %s834 = sadd.s32 %s832, %s833
        %s835 = smul.addr %s834, 8
        %s836 = scalar_lea.vmem %s6, %s835
        %s837 = sand.u32 %s232, 1
        %s838 = scalar_lea.sflag [#allocation6], %s837
        %s839 = sand.u32 %s232, 1
        %s840 = smul.addr %s839, 72
        %s841 = scalar_lea.vmem [#allocation12], %s840
        // Predicated region
        $region65: #{tpu_custom_call.1} parent=43 // pred_check
          %p842 = pneg %p214
        $region66: #{tpu_custom_call.1} parent=43 // pred_check_branch
          %844 = sbr.rel (%p842) target = $region68
        $region67: #{tpu_custom_call.1} parent=43 // pred_region
          _
        $region68: #{tpu_custom_call.1} parent=43 // pred_fallthru
          _
        // Predicated region
        $region69: #{tpu_custom_call.1} parent=43 // pred_check
          %p845 = pneg %p242
        $region70: #{tpu_custom_call.1} parent=43 // pred_check_branch
          %847 = sbr.rel (%p845) target = $region72
        $region71: #{tpu_custom_call.1} parent=43 // pred_region
          %849 = vsyncadd %s838, 0
          %s850 = smul.addr %s33, 9
          %s851 = sadd.s32 %s34, %s850
          %s852 = smul.addr %s851, 8
          %s853 = scalar_lea.hbm %s7, %s852
          %s854 = sshll.u32 %s841, 4
          %s855 = int_to_ptr.vmem [resolvable:$true] %s854
          %s856 = sshll.u32 %s853, 4
          %s857 = int_to_ptr.hbm [resolvable:$true] %s856
          %862 = dma.vmem_to_hbm [thread:$0]  %s855, 1152, %s857, %s838, 128, 128, 8
        $region72: #{tpu_custom_call.1} parent=43 // pred_fallthru
          _
      $region44: #{tpu_custom_call.1} parent=5 // pred_fallthru
        _
      %p863 = scmp.le.s32.totalorder 2, %s24
      // Predicated region
      $region73: #{tpu_custom_call.1} parent=5 // pred_check
        %p864 = pneg %p863
      $region74: #{tpu_custom_call.1} parent=5 // pred_check_branch
        %866 = sbr.rel (%p864) target = $region76
      $region75: #{tpu_custom_call.1} parent=5 // pred_region
        %s867 = ssub.s32 %s24, 2
        // Predicated region
        $region77: #{tpu_custom_call.1} parent=75 // pred_check
          %p868 = pneg %p220
        $region78: #{tpu_custom_call.1} parent=75 // pred_check_branch
          %870 = sbr.rel (%p868) target = $region80
        $region79: #{tpu_custom_call.1} parent=75 // pred_region
          %p871 = scmp.lt.s32.totalorder %s35, 3
          %s872 = scalar_select %p871, %s35, 3
          %p873 = scmp.lt.s32.totalorder %s36, 0
          %s874 = scalar_select %p873, %s36, 0
          %s875 = smul.addr %s872, 2
          %s876 = sadd.s32 %s874, %s875
          %s877 = smul.addr %s876, 8
          %s878 = scalar_lea.vmem %s6, %s877
        $region80: #{tpu_custom_call.1} parent=75 // pred_fallthru
          _
        // Predicated region
        $region81: #{tpu_custom_call.1} parent=75 // pred_check
          %p879 = pneg %p248
        $region82: #{tpu_custom_call.1} parent=75 // pred_check_branch
          %881 = sbr.rel (%p879) target = $region84
        $region83: #{tpu_custom_call.1} parent=75 // pred_region
          %s882 = sand.u32 %s233, 1
          %s883 = scalar_lea.sflag [#allocation6], %s882
          %s884 = sand.u32 %s233, 1
          %s885 = smul.addr %s884, 72
          %s886 = scalar_lea.vmem [#allocation12], %s885
          %888 = dma.done %s883, 1152
        $region84: #{tpu_custom_call.1} parent=75 // pred_fallthru
          _
      $region76: #{tpu_custom_call.1} parent=5 // pred_fallthru
        _
    $region6: #{tpu_custom_call.1} parent=1 // loop_footer
      %s28 = sadd.s32 1, %s24
    $region7: #{tpu_custom_call.1} parent=1 // loop_footer_branch
      %23 = sbr.rel target = $region3
    $region8: #{tpu_custom_call.1} parent=1 // loop_exit
      _
    %889 = vsyncpa [#allocation5], 1
    %s890 = scalar_lea.sflag [#allocation5], 1
    %891 = vsyncpa %s890, 1
    %892 = vsyncpa [#allocation10], 1
    %s893 = scalar_lea.sflag [#allocation10], 1
    %894 = vsyncpa %s893, 1
    %895 = vsyncpa [#allocation6], 1
    %s896 = scalar_lea.sflag [#allocation6], 1
    %897 = vsyncpa %s896, 1
    %898 = vsyncpa [#allocation7], 1
    %s899 = scalar_lea.sflag [#allocation7], 1
    %900 = vsyncpa %s899, 1

</llo_original>
